<compile_context>
chip_gen: v7x
topology: tpu7x:2x2x1
jax: 0.10.0
libtpu: 0.0.40
codegen_flags: <defaults>
</compile_context>

<pallas_src>
import jax
import jax.numpy as jnp
from jax import lax
from jax.experimental import pallas as pl
from jax.experimental.pallas import tpu as pltpu


def _round_up(x, m):
    return ((x + m - 1) // m) * m


# ----------------------------- Pallas kernel --------------------------------
def rnn_agent_kernel(
    x_ref,                 # (seq, Bb, D)      raw inputs (time-major, batch tile)
    h0_ref,                # (Bb, H)           initial hidden state
    w1_ref, b1_ref,        # (D, H), (1, H)    fc1 (pre-transposed)
    wih_ref, bih_ref,      # (H, 3H), (1, 3H)  input->hidden [r|z|n]; bih includes b_hr,b_hz
    whh_ref, bhn_ref,      # (H, 3H), (1, H)   hidden->hidden [r|z|n]; only b_hn kept
    wq_ref, bq_ref,        # (H, Ap), (1, Ap)  fused head (W2+Wm), lane-padded
    wm_ref, bm_ref,        # (H, Ap), (1, Ap)  mlp head (local_q), lane-padded
    gru_out_ref,           # (seq, Bb, H)      output: GRU hidden states
    q_ref,                 # (seq, Bb, Ap)     output: fc2(gru) + mlp(gru)
    lq_ref,                # (seq, Bb, Ap)     output: mlp(gru)  ("local_q")
    gi_ref,                # (seq, Bb, 3H)     VMEM scratch: precomputed input gates
):
    seq, Bb, D = x_ref.shape
    H = h0_ref.shape[1]

    # ---- Phase 1: batched input-side projections for all timesteps (big matmuls) ----
    x2 = x_ref[...].reshape(seq * Bb, D)                                   # (seq*Bb, D)
    a = jnp.dot(x2, w1_ref[...], preferred_element_type=jnp.float32) + b1_ref[...]
    a = jnp.maximum(a, 0.0)                                                # relu(fc1)
    gi = jnp.dot(a, wih_ref[...], preferred_element_type=jnp.float32) + bih_ref[...]
    gi_ref[...] = gi.reshape(seq, Bb, 3 * H)

    # hoisted loop-invariant loads (avoid re-materializing broadcasts each step)
    whh = whh_ref[...]
    bhn = bhn_ref[...]

    # ---- Phase 2: sequential GRU recurrence (one small matmul + gate math per step) ----
    def step(t, h_prev):
        gh = jnp.dot(h_prev, whh, preferred_element_type=jnp.float32)      # (Bb, 3H)
        gi_t = gi_ref[t]                                                    # (Bb, 3H)
        r = jax.nn.sigmoid(gi_t[:, :H] + gh[:, :H])
        z = jax.nn.sigmoid(gi_t[:, H:2 * H] + gh[:, H:2 * H])
        n = jnp.tanh(gi_t[:, 2 * H:] + r * (gh[:, 2 * H:] + bhn))
        h = (1.0 - z) * n + z * h_prev
        gru_out_ref[t] = h
        return h

    lax.fori_loop(0, seq, step, h0_ref[...], unroll=True)

    # ---- Phase 3: batched output heads over all timesteps, lane-dense stores ----
    g = gru_out_ref[...].reshape(seq * Bb, H)
    lq = jnp.dot(g, wm_ref[...], preferred_element_type=jnp.float32) + bm_ref[...]
    q = jnp.dot(g, wq_ref[...], preferred_element_type=jnp.float32) + bq_ref[...]
    q_ref[...] = q.reshape(seq, Bb, -1)
    lq_ref[...] = lq.reshape(seq, Bb, -1)


# ------------------------------ JAX wrapper ---------------------------------
def rnn_agent_forward(inputs, hidden_state, params, n_agents, *, batch_block=None):
    """Forward pass matching RNNAgent.forward for 4-D inputs.

    inputs:       (bs, n_agents, seq, input_dim)
    hidden_state: (1, bs*n_agents, H) or (bs*n_agents, H)
    returns (q, gru_out, local_q, q_f) with PyTorch shapes:
      q, local_q: (bs, seq, n_agents, n_actions)
      gru_out:    (bs*n_agents, seq, H)
      q_f:        0
    """
    bs, na, seq, D = inputs.shape
    assert na == n_agents
    B = bs * na
    H = params["fc1_w"].shape[0]
    A = params["fc2_w"].shape[0]

    h0 = hidden_state[0] if hidden_state.ndim == 3 else hidden_state
    h0 = h0.astype(jnp.float32)

    # batch tile: multiple of 8 sublanes; tiles pipeline through VMEM at large B
    if batch_block is None:
        batch_block = min(_round_up(B, 8), 256)
    B_blk = _round_up(batch_block, 8)
    B_pad = _round_up(B, B_blk)
    nb = B_pad // B_blk
    A_pad = _round_up(A, 128)          # lane-dense head outputs (unmasked stores)

    # time-major layout, batch padded to the tile size (padded rows are ignored)
    x = inputs.reshape(B, seq, D).astype(jnp.float32)
    x = jnp.pad(x, ((0, B_pad - B), (0, 0), (0, 0)))
    x_tm = jnp.transpose(x, (1, 0, 2))                      # (seq, B_pad, D)
    h0p = jnp.pad(h0, ((0, B_pad - B), (0, 0)))             # (B_pad, H)

    # ---- pack / fuse parameters (PyTorch gate order r, z, n) ----
    w_ih, w_hh = params["gru_w_ih"], params["gru_w_hh"]     # (3H, H)
    b_ih, b_hh = params["gru_b_ih"], params["gru_b_hh"]     # (3H,)
    w1 = params["fc1_w"].T                                   # (D, H)
    b1 = params["fc1_b"].reshape(1, H)
    wih = w_ih.T                                              # (H, 3H) cols [r|z|n]
    whh = w_hh.T                                              # (H, 3H)
    # fold b_ih and the r/z parts of b_hh into the precomputed input-gate bias
    bih = (b_ih + jnp.concatenate(
        [b_hh[:2 * H], jnp.zeros((H,), jnp.float32)])).reshape(1, 3 * H)
    bhn = b_hh[2 * H:].reshape(1, H)                          # stays inside r*(...)
    # fused q head: q = g@(W2+Wm)^T + (b2+bm);  local_q = g@Wm^T + bm
    wq = (params["fc2_w"] + params["mlp_w"]).T                # (H, A)
    bq = (params["fc2_b"] + params["mlp_b"]).reshape(1, A)
    wm = params["mlp_w"].T
    bm = params["mlp_b"].reshape(1, A)
    pad_lanes = lambda w: jnp.pad(w, ((0, 0), (0, A_pad - A)))
    wq, bq, wm, bm = pad_lanes(wq), pad_lanes(bq), pad_lanes(wm), pad_lanes(bm)

    full = lambda shape: pl.BlockSpec(shape, lambda j: (0,) * len(shape))

    out_shapes = (
        jax.ShapeDtypeStruct((seq, B_pad, H), jnp.float32),      # gru_out (time-major)
        jax.ShapeDtypeStruct((seq, B_pad, A_pad), jnp.float32),  # q       (time-major)
        jax.ShapeDtypeStruct((seq, B_pad, A_pad), jnp.float32),  # local_q (time-major)
    )
    fn = pl.pallas_call(
        rnn_agent_kernel,
        out_shape=out_shapes,
        grid=(nb,),
        in_specs=[
            pl.BlockSpec((seq, B_blk, D), lambda j: (0, j, 0)),
            pl.BlockSpec((B_blk, H), lambda j: (j, 0)),
            full((D, H)), full((1, H)),
            full((H, 3 * H)), full((1, 3 * H)),
            full((H, 3 * H)), full((1, H)),
            full((H, A_pad)), full((1, A_pad)),
            full((H, A_pad)), full((1, A_pad)),
        ],
        out_specs=(
            pl.BlockSpec((seq, B_blk, H), lambda j: (0, j, 0)),
            pl.BlockSpec((seq, B_blk, A_pad), lambda j: (0, j, 0)),
            pl.BlockSpec((seq, B_blk, A_pad), lambda j: (0, j, 0)),
        ),
        scratch_shapes=[pltpu.VMEM((seq, B_blk, 3 * H), jnp.float32)],
        compiler_params=pltpu.CompilerParams(dimension_semantics=("parallel",)),
    )
    gru_tm, q_tm, lq_tm = fn(x_tm, h0p, w1, b1, wih, bih, whh, bhn, wq, bq, wm, bm)

    # strip batch padding / lane padding, back to PyTorch conventions
    gru_out = jnp.transpose(gru_tm[:, :B, :], (1, 0, 2))              # (B, seq, H)
    q_flat = jnp.transpose(q_tm[:, :B, :A], (1, 0, 2))                # (B, seq, A)
    lq_flat = jnp.transpose(lq_tm[:, :B, :A], (1, 0, 2))              # (B, seq, A)

    q = jnp.transpose(q_flat.reshape(bs, na, seq, A), (0, 2, 1, 3))         # (bs, seq, na, A)
    local_q = jnp.transpose(lq_flat.reshape(bs, na, seq, A), (0, 2, 1, 3))  # (bs, seq, na, A)
    q_f = 0
    return q, gru_out, local_q, q_f


# -------------------------- pure-JAX reference -------------------------------
def rnn_agent_reference(inputs, hidden_state, params, n_agents):
    bs, na, seq, D = inputs.shape
    B = bs * na
    H = params["fc1_w"].shape[0]
    A = params["fc2_w"].shape[0]
    h = hidden_state[0] if hidden_state.ndim == 3 else hidden_state
    x = inputs.reshape(B, seq, D)
    a = jax.nn.relu(jnp.einsum("bsd,hd->bsh", x, params["fc1_w"]) + params["fc1_b"])
    w_ih, w_hh = params["gru_w_ih"], params["gru_w_hh"]
    b_ih, b_hh = params["gru_b_ih"], params["gru_b_hh"]
    outs = []
    for t in range(seq):
        xt = a[:, t, :]
        gi = xt @ w_ih.T + b_ih
        gh = h @ w_hh.T + b_hh
        r = jax.nn.sigmoid(gi[:, :H] + gh[:, :H])
        z = jax.nn.sigmoid(gi[:, H:2 * H] + gh[:, H:2 * H])
        n = jnp.tanh(gi[:, 2 * H:] + r * gh[:, 2 * H:])
        h = (1 - z) * n + z * h
        outs.append(h)
    gru_out = jnp.stack(outs, axis=1)                               # (B, seq, H)
    q_flat = gru_out @ params["fc2_w"].T + params["fc2_b"]
    lq_flat = gru_out @ params["mlp_w"].T + params["mlp_b"]
    q_flat = q_flat + lq_flat
    q = jnp.transpose(q_flat.reshape(bs, na, seq, A), (0, 2, 1, 3))
    local_q = jnp.transpose(lq_flat.reshape(bs, na, seq, A), (0, 2, 1, 3))
    return q, gru_out, local_q, 0


# --------------------------------- main --------------------------------------
if __name__ == "__main__":
    bs, n_agents, seq = 2, 3, 8
    input_dim, H, n_actions = 10, 32, 5
    B = bs * n_agents

    key = jax.random.PRNGKey(0)
    ks = jax.random.split(key, 16)
    u = lambda k, shape, s: jax.random.uniform(k, shape, jnp.float32, -s, s)
    sH = 1.0 / jnp.sqrt(H)
    sD = 1.0 / jnp.sqrt(input_dim)

    params = {
        "fc1_w": u(ks[0], (H, input_dim), sD), "fc1_b": u(ks[1], (H,), sD),
        "gru_w_ih": u(ks[2], (3 * H, H), sH), "gru_w_hh": u(ks[3], (3 * H, H), sH),
        "gru_b_ih": u(ks[4], (3 * H,), sH), "gru_b_hh": u(ks[5], (3 * H,), sH),
        "fc2_w": u(ks[6], (n_actions, H), sH), "fc2_b": u(ks[7], (n_actions,), sH),
        "fc3_w": u(ks[8], (n_actions, H), sH), "fc3_b": u(ks[9], (n_actions,), sH),  # unused in forward
        "mlp_w": u(ks[10], (n_actions, H), sH), "mlp_b": u(ks[11], (n_actions,), sH),
    }

    inputs = jax.random.normal(ks[12], (bs, n_agents, seq, input_dim), jnp.float32)
    hidden_state = jnp.zeros((1, B, H), jnp.float32)  # init_hidden() broadcast to batch

    q, gru_out, local_q, q_f = rnn_agent_forward(inputs, hidden_state, params, n_agents)
    jax.block_until_ready((q, gru_out, local_q))

    q_r, gru_r, lq_r, _ = rnn_agent_reference(inputs, hidden_state, params, n_agents)
    assert q.shape == (bs, seq, n_agents, n_actions)
    assert gru_out.shape == (B, seq, H)
    assert local_q.shape == (bs, seq, n_agents, n_actions)
    assert jnp.allclose(q, q_r, atol=1e-4, rtol=1e-4)
    assert jnp.allclose(gru_out, gru_r, atol=1e-4, rtol=1e-4)
    assert jnp.allclose(local_q, lq_r, atol=1e-4, rtol=1e-4)
    assert q_f == 0

    print("KERNEL_OK")
</pallas_src>

<mosaic_0001>
module attributes {stable_mosaic.version = 11 : i64} {
  func.func @rnn_agent_kernel(%arg0: i32, %arg1: memref<8x8x10xf32, #tpu.memory_space<vmem>>, %arg2: memref<8x32xf32, #tpu.memory_space<vmem>>, %arg3: memref<10x32xf32, #tpu.memory_space<vmem>>, %arg4: memref<1x32xf32, #tpu.memory_space<vmem>>, %arg5: memref<32x96xf32, #tpu.memory_space<vmem>>, %arg6: memref<1x96xf32, #tpu.memory_space<vmem>>, %arg7: memref<32x96xf32, #tpu.memory_space<vmem>>, %arg8: memref<1x32xf32, #tpu.memory_space<vmem>>, %arg9: memref<32x128xf32, #tpu.memory_space<vmem>>, %arg10: memref<1x128xf32, #tpu.memory_space<vmem>>, %arg11: memref<32x128xf32, #tpu.memory_space<vmem>>, %arg12: memref<1x128xf32, #tpu.memory_space<vmem>>, %arg13: memref<8x8x32xf32, #tpu.memory_space<vmem>>, %arg14: memref<8x8x128xf32, #tpu.memory_space<vmem>>, %arg15: memref<8x8x128xf32, #tpu.memory_space<vmem>>, %arg16: memref<8x8x96xf32, #tpu.memory_space<vmem>>) attributes {dimension_semantics = [#tpu.dimension_semantics<parallel>], iteration_bounds = array<i64: 1>, scalar_prefetch = 0 : i64, scratch_operands = 1 : i64, tpu.core_type = #tpu.core_type<tc>, window_params = [{transform_indices = @transform_0, window_bounds = array<i64: 8, 8, 10>}, {transform_indices = @transform_1, window_bounds = array<i64: 8, 32>}, {pipeline_mode = #tpu.pipeline_mode<synchronous>, transform_indices = @transform_2, window_bounds = array<i64: 10, 32>}, {pipeline_mode = #tpu.pipeline_mode<synchronous>, transform_indices = @transform_3, window_bounds = array<i64: 1, 32>}, {pipeline_mode = #tpu.pipeline_mode<synchronous>, transform_indices = @transform_4, window_bounds = array<i64: 32, 96>}, {pipeline_mode = #tpu.pipeline_mode<synchronous>, transform_indices = @transform_5, window_bounds = array<i64: 1, 96>}, {pipeline_mode = #tpu.pipeline_mode<synchronous>, transform_indices = @transform_6, window_bounds = array<i64: 32, 96>}, {pipeline_mode = #tpu.pipeline_mode<synchronous>, transform_indices = @transform_7, window_bounds = array<i64: 1, 32>}, {pipeline_mode = #tpu.pipeline_mode<synchronous>, transform_indices = @transform_8, window_bounds = array<i64: 32, 128>}, {pipeline_mode = #tpu.pipeline_mode<synchronous>, transform_indices = @transform_9, window_bounds = array<i64: 1, 128>}, {pipeline_mode = #tpu.pipeline_mode<synchronous>, transform_indices = @transform_10, window_bounds = array<i64: 32, 128>}, {pipeline_mode = #tpu.pipeline_mode<synchronous>, transform_indices = @transform_11, window_bounds = array<i64: 1, 128>}, {transform_indices = @transform_12, window_bounds = array<i64: 8, 8, 32>}, {transform_indices = @transform_13, window_bounds = array<i64: 8, 8, 128>}, {transform_indices = @transform_14, window_bounds = array<i64: 8, 8, 128>}]} {
    %c0 = arith.constant 0 : index
    %c0_0 = arith.constant 0 : index
    %c0_1 = arith.constant 0 : index
    %0 = vector.load %arg1[%c0, %c0_0, %c0_1] : memref<8x8x10xf32, #tpu.memory_space<vmem>>, vector<8x8x10xf32>
    %1 = vector.shape_cast %0 : vector<8x8x10xf32> to vector<64x10xf32>
    %c0_2 = arith.constant 0 : index
    %c0_3 = arith.constant 0 : index
    %2 = vector.load %arg3[%c0_2, %c0_3] : memref<10x32xf32, #tpu.memory_space<vmem>>, vector<10x32xf32>
    %cst = arith.constant dense<0.000000e+00> : vector<64x32xf32>
    %3 = tpu.matmul %1, %2, %cst {dimension_numbers = #tpu.dot_dimension_numbers<[1], [0], [0], [1], [0, 0, 1, 1], [], []>} : vector<64x10xf32>, vector<10x32xf32>, vector<64x32xf32> -> vector<64x32xf32>
    %c0_4 = arith.constant 0 : index
    %c0_5 = arith.constant 0 : index
    %4 = vector.load %arg4[%c0_4, %c0_5] : memref<1x32xf32, #tpu.memory_space<vmem>>, vector<1x32xf32>
    %5 = vector.broadcast %4 : vector<1x32xf32> to vector<64x32xf32>
    %6 = arith.addf %3, %5 : vector<64x32xf32>
    %cst_6 = arith.constant 0.000000e+00 : f32
    %7 = vector.broadcast %cst_6 : f32 to vector<64x32xf32>
    %8 = arith.maximumf %6, %7 : vector<64x32xf32>
    %c0_7 = arith.constant 0 : index
    %c0_8 = arith.constant 0 : index
    %9 = vector.load %arg5[%c0_7, %c0_8] : memref<32x96xf32, #tpu.memory_space<vmem>>, vector<32x96xf32>
    %cst_9 = arith.constant dense<0.000000e+00> : vector<64x96xf32>
    %10 = tpu.matmul %8, %9, %cst_9 {dimension_numbers = #tpu.dot_dimension_numbers<[1], [0], [0], [1], [0, 0, 1, 1], [], []>} : vector<64x32xf32>, vector<32x96xf32>, vector<64x96xf32> -> vector<64x96xf32>
    %c0_10 = arith.constant 0 : index
    %c0_11 = arith.constant 0 : index
    %11 = vector.load %arg6[%c0_10, %c0_11] : memref<1x96xf32, #tpu.memory_space<vmem>>, vector<1x96xf32>
    %12 = vector.broadcast %11 : vector<1x96xf32> to vector<64x96xf32>
    %13 = arith.addf %10, %12 : vector<64x96xf32>
    %14 = vector.shape_cast %13 : vector<64x96xf32> to vector<8x8x96xf32>
    %c0_12 = arith.constant 0 : index
    %c0_13 = arith.constant 0 : index
    %c0_14 = arith.constant 0 : index
    %15 = vector.load %arg16[%c0_12, %c0_13, %c0_14] : memref<8x8x96xf32, #tpu.memory_space<vmem>>, vector<8x8x96xf32>
    tpu.vector_store %arg16[%c0_12, %c0_13, %c0_14], %14 {strides = array<i32>} : memref<8x8x96xf32, #tpu.memory_space<vmem>>, vector<8x8x96xf32>,
    %c0_15 = arith.constant 0 : index
    %c0_16 = arith.constant 0 : index
    %16 = vector.load %arg7[%c0_15, %c0_16] : memref<32x96xf32, #tpu.memory_space<vmem>>, vector<32x96xf32>
    %c0_17 = arith.constant 0 : index
    %c0_18 = arith.constant 0 : index
    %17 = vector.load %arg8[%c0_17, %c0_18] : memref<1x32xf32, #tpu.memory_space<vmem>>, vector<1x32xf32>
    %c0_19 = arith.constant 0 : index
    %c0_20 = arith.constant 0 : index
    %18 = vector.load %arg2[%c0_19, %c0_20] : memref<8x32xf32, #tpu.memory_space<vmem>>, vector<8x32xf32>
    %c0_i32 = arith.constant 0 : i32
    %cst_21 = arith.constant dense<0.000000e+00> : vector<8x96xf32>
    %19 = tpu.matmul %18, %16, %cst_21 {dimension_numbers = #tpu.dot_dimension_numbers<[1], [0], [0], [1], [0, 0, 1, 1], [], []>} : vector<8x32xf32>, vector<32x96xf32>, vector<8x96xf32> -> vector<8x96xf32>
    %20 = arith.index_cast %c0_i32 : i32 to index
    %c0_22 = arith.constant 0 : index
    %c0_23 = arith.constant 0 : index
    %21 = vector.load %arg16[%20, %c0_22, %c0_23] : memref<8x8x96xf32, #tpu.memory_space<vmem>>, vector<1x8x96xf32>
    %22 = vector.shape_cast %21 : vector<1x8x96xf32> to vector<8x96xf32>
    %23 = vector.extract_strided_slice %22 {offsets = [0, 0], sizes = [8, 32], strides = [1, 1]} : vector<8x96xf32> to vector<8x32xf32>
    %24 = vector.extract_strided_slice %19 {offsets = [0, 0], sizes = [8, 32], strides = [1, 1]} : vector<8x96xf32> to vector<8x32xf32>
    %25 = arith.addf %23, %24 : vector<8x32xf32>
    %26 = arith.negf %25 : vector<8x32xf32>
    %27 = math.exp %26 : vector<8x32xf32>
    %cst_24 = arith.constant 1.000000e+00 : f32
    %28 = vector.broadcast %cst_24 : f32 to vector<8x32xf32>
    %29 = arith.addf %28, %27 : vector<8x32xf32>
    %30 = arith.divf %28, %29 : vector<8x32xf32>
    %31 = vector.extract_strided_slice %22 {offsets = [0, 32], sizes = [8, 32], strides = [1, 1]} : vector<8x96xf32> to vector<8x32xf32>
    %32 = vector.extract_strided_slice %19 {offsets = [0, 32], sizes = [8, 32], strides = [1, 1]} : vector<8x96xf32> to vector<8x32xf32>
    %33 = arith.addf %31, %32 : vector<8x32xf32>
    %34 = arith.negf %33 : vector<8x32xf32>
    %35 = math.exp %34 : vector<8x32xf32>
    %cst_25 = arith.constant 1.000000e+00 : f32
    %36 = vector.broadcast %cst_25 : f32 to vector<8x32xf32>
    %37 = arith.addf %36, %35 : vector<8x32xf32>
    %38 = arith.divf %36, %37 : vector<8x32xf32>
    %39 = vector.extract_strided_slice %22 {offsets = [0, 64], sizes = [8, 32], strides = [1, 1]} : vector<8x96xf32> to vector<8x32xf32>
    %40 = vector.extract_strided_slice %19 {offsets = [0, 64], sizes = [8, 32], strides = [1, 1]} : vector<8x96xf32> to vector<8x32xf32>
    %41 = vector.broadcast %17 : vector<1x32xf32> to vector<8x32xf32>
    %42 = arith.addf %40, %41 : vector<8x32xf32>
    %43 = arith.mulf %30, %42 : vector<8x32xf32>
    %44 = arith.addf %39, %43 : vector<8x32xf32>
    %45 = math.tanh %44 : vector<8x32xf32>
    %cst_26 = arith.constant 1.000000e+00 : f32
    %46 = vector.broadcast %cst_26 : f32 to vector<8x32xf32>
    %47 = arith.subf %46, %38 : vector<8x32xf32>
    %48 = arith.mulf %47, %45 : vector<8x32xf32>
    %49 = arith.mulf %38, %18 : vector<8x32xf32>
    %50 = arith.addf %48, %49 : vector<8x32xf32>
    %51 = arith.index_cast %c0_i32 : i32 to index
    %c0_27 = arith.constant 0 : index
    %c0_28 = arith.constant 0 : index
    %52 = vector.load %arg13[%51, %c0_27, %c0_28] : memref<8x8x32xf32, #tpu.memory_space<vmem>>, vector<1x8x32xf32>
    %53 = vector.shape_cast %52 : vector<1x8x32xf32> to vector<8x32xf32>
    %54 = vector.shape_cast %50 : vector<8x32xf32> to vector<1x8x32xf32>
    tpu.vector_store %arg13[%51, %c0_27, %c0_28], %54 {strides = array<i32>} : memref<8x8x32xf32, #tpu.memory_space<vmem>>, vector<1x8x32xf32>,
    %c1_i32 = arith.constant 1 : i32
    %cst_29 = arith.constant dense<0.000000e+00> : vector<8x96xf32>
    %55 = tpu.matmul %50, %16, %cst_29 {dimension_numbers = #tpu.dot_dimension_numbers<[1], [0], [0], [1], [0, 0, 1, 1], [], []>} : vector<8x32xf32>, vector<32x96xf32>, vector<8x96xf32> -> vector<8x96xf32>
    %56 = arith.index_cast %c1_i32 : i32 to index
    %c0_30 = arith.constant 0 : index
    %c0_31 = arith.constant 0 : index
    %57 = vector.load %arg16[%56, %c0_30, %c0_31] : memref<8x8x96xf32, #tpu.memory_space<vmem>>, vector<1x8x96xf32>
    %58 = vector.shape_cast %57 : vector<1x8x96xf32> to vector<8x96xf32>
    %59 = vector.extract_strided_slice %58 {offsets = [0, 0], sizes = [8, 32], strides = [1, 1]} : vector<8x96xf32> to vector<8x32xf32>
    %60 = vector.extract_strided_slice %55 {offsets = [0, 0], sizes = [8, 32], strides = [1, 1]} : vector<8x96xf32> to vector<8x32xf32>
    %61 = arith.addf %59, %60 : vector<8x32xf32>
    %62 = arith.negf %61 : vector<8x32xf32>
    %63 = math.exp %62 : vector<8x32xf32>
    %cst_32 = arith.constant 1.000000e+00 : f32
    %64 = vector.broadcast %cst_32 : f32 to vector<8x32xf32>
    %65 = arith.addf %64, %63 : vector<8x32xf32>
    %66 = arith.divf %64, %65 : vector<8x32xf32>
    %67 = vector.extract_strided_slice %58 {offsets = [0, 32], sizes = [8, 32], strides = [1, 1]} : vector<8x96xf32> to vector<8x32xf32>
    %68 = vector.extract_strided_slice %55 {offsets = [0, 32], sizes = [8, 32], strides = [1, 1]} : vector<8x96xf32> to vector<8x32xf32>
    %69 = arith.addf %67, %68 : vector<8x32xf32>
    %70 = arith.negf %69 : vector<8x32xf32>
    %71 = math.exp %70 : vector<8x32xf32>
    %cst_33 = arith.constant 1.000000e+00 : f32
    %72 = vector.broadcast %cst_33 : f32 to vector<8x32xf32>
    %73 = arith.addf %72, %71 : vector<8x32xf32>
    %74 = arith.divf %72, %73 : vector<8x32xf32>
    %75 = vector.extract_strided_slice %58 {offsets = [0, 64], sizes = [8, 32], strides = [1, 1]} : vector<8x96xf32> to vector<8x32xf32>
    %76 = vector.extract_strided_slice %55 {offsets = [0, 64], sizes = [8, 32], strides = [1, 1]} : vector<8x96xf32> to vector<8x32xf32>
    %77 = vector.broadcast %17 : vector<1x32xf32> to vector<8x32xf32>
    %78 = arith.addf %76, %77 : vector<8x32xf32>
    %79 = arith.mulf %66, %78 : vector<8x32xf32>
    %80 = arith.addf %75, %79 : vector<8x32xf32>
    %81 = math.tanh %80 : vector<8x32xf32>
    %cst_34 = arith.constant 1.000000e+00 : f32
    %82 = vector.broadcast %cst_34 : f32 to vector<8x32xf32>
    %83 = arith.subf %82, %74 : vector<8x32xf32>
    %84 = arith.mulf %83, %81 : vector<8x32xf32>
    %85 = arith.mulf %74, %50 : vector<8x32xf32>
    %86 = arith.addf %84, %85 : vector<8x32xf32>
    %87 = arith.index_cast %c1_i32 : i32 to index
    %c0_35 = arith.constant 0 : index
    %c0_36 = arith.constant 0 : index
    %88 = vector.load %arg13[%87, %c0_35, %c0_36] : memref<8x8x32xf32, #tpu.memory_space<vmem>>, vector<1x8x32xf32>
    %89 = vector.shape_cast %88 : vector<1x8x32xf32> to vector<8x32xf32>
    %90 = vector.shape_cast %86 : vector<8x32xf32> to vector<1x8x32xf32>
    tpu.vector_store %arg13[%87, %c0_35, %c0_36], %90 {strides = array<i32>} : memref<8x8x32xf32, #tpu.memory_space<vmem>>, vector<1x8x32xf32>,
    %c2_i32 = arith.constant 2 : i32
    %cst_37 = arith.constant dense<0.000000e+00> : vector<8x96xf32>
    %91 = tpu.matmul %86, %16, %cst_37 {dimension_numbers = #tpu.dot_dimension_numbers<[1], [0], [0], [1], [0, 0, 1, 1], [], []>} : vector<8x32xf32>, vector<32x96xf32>, vector<8x96xf32> -> vector<8x96xf32>
    %92 = arith.index_cast %c2_i32 : i32 to index
    %c0_38 = arith.constant 0 : index
    %c0_39 = arith.constant 0 : index
    %93 = vector.load %arg16[%92, %c0_38, %c0_39] : memref<8x8x96xf32, #tpu.memory_space<vmem>>, vector<1x8x96xf32>
    %94 = vector.shape_cast %93 : vector<1x8x96xf32> to vector<8x96xf32>
    %95 = vector.extract_strided_slice %94 {offsets = [0, 0], sizes = [8, 32], strides = [1, 1]} : vector<8x96xf32> to vector<8x32xf32>
    %96 = vector.extract_strided_slice %91 {offsets = [0, 0], sizes = [8, 32], strides = [1, 1]} : vector<8x96xf32> to vector<8x32xf32>
    %97 = arith.addf %95, %96 : vector<8x32xf32>
    %98 = arith.negf %97 : vector<8x32xf32>
    %99 = math.exp %98 : vector<8x32xf32>
    %cst_40 = arith.constant 1.000000e+00 : f32
    %100 = vector.broadcast %cst_40 : f32 to vector<8x32xf32>
    %101 = arith.addf %100, %99 : vector<8x32xf32>
    %102 = arith.divf %100, %101 : vector<8x32xf32>
    %103 = vector.extract_strided_slice %94 {offsets = [0, 32], sizes = [8, 32], strides = [1, 1]} : vector<8x96xf32> to vector<8x32xf32>
    %104 = vector.extract_strided_slice %91 {offsets = [0, 32], sizes = [8, 32], strides = [1, 1]} : vector<8x96xf32> to vector<8x32xf32>
    %105 = arith.addf %103, %104 : vector<8x32xf32>
    %106 = arith.negf %105 : vector<8x32xf32>
    %107 = math.exp %106 : vector<8x32xf32>
    %cst_41 = arith.constant 1.000000e+00 : f32
    %108 = vector.broadcast %cst_41 : f32 to vector<8x32xf32>
    %109 = arith.addf %108, %107 : vector<8x32xf32>
    %110 = arith.divf %108, %109 : vector<8x32xf32>
    %111 = vector.extract_strided_slice %94 {offsets = [0, 64], sizes = [8, 32], strides = [1, 1]} : vector<8x96xf32> to vector<8x32xf32>
    %112 = vector.extract_strided_slice %91 {offsets = [0, 64], sizes = [8, 32], strides = [1, 1]} : vector<8x96xf32> to vector<8x32xf32>
    %113 = vector.broadcast %17 : vector<1x32xf32> to vector<8x32xf32>
    %114 = arith.addf %112, %113 : vector<8x32xf32>
    %115 = arith.mulf %102, %114 : vector<8x32xf32>
    %116 = arith.addf %111, %115 : vector<8x32xf32>
    %117 = math.tanh %116 : vector<8x32xf32>
    %cst_42 = arith.constant 1.000000e+00 : f32
    %118 = vector.broadcast %cst_42 : f32 to vector<8x32xf32>
    %119 = arith.subf %118, %110 : vector<8x32xf32>
    %120 = arith.mulf %119, %117 : vector<8x32xf32>
    %121 = arith.mulf %110, %86 : vector<8x32xf32>
    %122 = arith.addf %120, %121 : vector<8x32xf32>
    %123 = arith.index_cast %c2_i32 : i32 to index
    %c0_43 = arith.constant 0 : index
    %c0_44 = arith.constant 0 : index
    %124 = vector.load %arg13[%123, %c0_43, %c0_44] : memref<8x8x32xf32, #tpu.memory_space<vmem>>, vector<1x8x32xf32>
    %125 = vector.shape_cast %124 : vector<1x8x32xf32> to vector<8x32xf32>
    %126 = vector.shape_cast %122 : vector<8x32xf32> to vector<1x8x32xf32>
    tpu.vector_store %arg13[%123, %c0_43, %c0_44], %126 {strides = array<i32>} : memref<8x8x32xf32, #tpu.memory_space<vmem>>, vector<1x8x32xf32>,
    %c3_i32 = arith.constant 3 : i32
    %cst_45 = arith.constant dense<0.000000e+00> : vector<8x96xf32>
    %127 = tpu.matmul %122, %16, %cst_45 {dimension_numbers = #tpu.dot_dimension_numbers<[1], [0], [0], [1], [0, 0, 1, 1], [], []>} : vector<8x32xf32>, vector<32x96xf32>, vector<8x96xf32> -> vector<8x96xf32>
    %128 = arith.index_cast %c3_i32 : i32 to index
    %c0_46 = arith.constant 0 : index
    %c0_47 = arith.constant 0 : index
    %129 = vector.load %arg16[%128, %c0_46, %c0_47] : memref<8x8x96xf32, #tpu.memory_space<vmem>>, vector<1x8x96xf32>
    %130 = vector.shape_cast %129 : vector<1x8x96xf32> to vector<8x96xf32>
    %131 = vector.extract_strided_slice %130 {offsets = [0, 0], sizes = [8, 32], strides = [1, 1]} : vector<8x96xf32> to vector<8x32xf32>
    %132 = vector.extract_strided_slice %127 {offsets = [0, 0], sizes = [8, 32], strides = [1, 1]} : vector<8x96xf32> to vector<8x32xf32>
    %133 = arith.addf %131, %132 : vector<8x32xf32>
    %134 = arith.negf %133 : vector<8x32xf32>
    %135 = math.exp %134 : vector<8x32xf32>
    %cst_48 = arith.constant 1.000000e+00 : f32
    %136 = vector.broadcast %cst_48 : f32 to vector<8x32xf32>
    %137 = arith.addf %136, %135 : vector<8x32xf32>
    %138 = arith.divf %136, %137 : vector<8x32xf32>
    %139 = vector.extract_strided_slice %130 {offsets = [0, 32], sizes = [8, 32], strides = [1, 1]} : vector<8x96xf32> to vector<8x32xf32>
    %140 = vector.extract_strided_slice %127 {offsets = [0, 32], sizes = [8, 32], strides = [1, 1]} : vector<8x96xf32> to vector<8x32xf32>
    %141 = arith.addf %139, %140 : vector<8x32xf32>
    %142 = arith.negf %141 : vector<8x32xf32>
    %143 = math.exp %142 : vector<8x32xf32>
    %cst_49 = arith.constant 1.000000e+00 : f32
    %144 = vector.broadcast %cst_49 : f32 to vector<8x32xf32>
    %145 = arith.addf %144, %143 : vector<8x32xf32>
    %146 = arith.divf %144, %145 : vector<8x32xf32>
    %147 = vector.extract_strided_slice %130 {offsets = [0, 64], sizes = [8, 32], strides = [1, 1]} : vector<8x96xf32> to vector<8x32xf32>
    %148 = vector.extract_strided_slice %127 {offsets = [0, 64], sizes = [8, 32], strides = [1, 1]} : vector<8x96xf32> to vector<8x32xf32>
    %149 = vector.broadcast %17 : vector<1x32xf32> to vector<8x32xf32>
    %150 = arith.addf %148, %149 : vector<8x32xf32>
    %151 = arith.mulf %138, %150 : vector<8x32xf32>
    %152 = arith.addf %147, %151 : vector<8x32xf32>
    %153 = math.tanh %152 : vector<8x32xf32>
    %cst_50 = arith.constant 1.000000e+00 : f32
    %154 = vector.broadcast %cst_50 : f32 to vector<8x32xf32>
    %155 = arith.subf %154, %146 : vector<8x32xf32>
    %156 = arith.mulf %155, %153 : vector<8x32xf32>
    %157 = arith.mulf %146, %122 : vector<8x32xf32>
    %158 = arith.addf %156, %157 : vector<8x32xf32>
    %159 = arith.index_cast %c3_i32 : i32 to index
    %c0_51 = arith.constant 0 : index
    %c0_52 = arith.constant 0 : index
    %160 = vector.load %arg13[%159, %c0_51, %c0_52] : memref<8x8x32xf32, #tpu.memory_space<vmem>>, vector<1x8x32xf32>
    %161 = vector.shape_cast %160 : vector<1x8x32xf32> to vector<8x32xf32>
    %162 = vector.shape_cast %158 : vector<8x32xf32> to vector<1x8x32xf32>
    tpu.vector_store %arg13[%159, %c0_51, %c0_52], %162 {strides = array<i32>} : memref<8x8x32xf32, #tpu.memory_space<vmem>>, vector<1x8x32xf32>,
    %c4_i32 = arith.constant 4 : i32
    %cst_53 = arith.constant dense<0.000000e+00> : vector<8x96xf32>
    %163 = tpu.matmul %158, %16, %cst_53 {dimension_numbers = #tpu.dot_dimension_numbers<[1], [0], [0], [1], [0, 0, 1, 1], [], []>} : vector<8x32xf32>, vector<32x96xf32>, vector<8x96xf32> -> vector<8x96xf32>
    %164 = arith.index_cast %c4_i32 : i32 to index
    %c0_54 = arith.constant 0 : index
    %c0_55 = arith.constant 0 : index
    %165 = vector.load %arg16[%164, %c0_54, %c0_55] : memref<8x8x96xf32, #tpu.memory_space<vmem>>, vector<1x8x96xf32>
    %166 = vector.shape_cast %165 : vector<1x8x96xf32> to vector<8x96xf32>
    %167 = vector.extract_strided_slice %166 {offsets = [0, 0], sizes = [8, 32], strides = [1, 1]} : vector<8x96xf32> to vector<8x32xf32>
    %168 = vector.extract_strided_slice %163 {offsets = [0, 0], sizes = [8, 32], strides = [1, 1]} : vector<8x96xf32> to vector<8x32xf32>
    %169 = arith.addf %167, %168 : vector<8x32xf32>
    %170 = arith.negf %169 : vector<8x32xf32>
    %171 = math.exp %170 : vector<8x32xf32>
    %cst_56 = arith.constant 1.000000e+00 : f32
    %172 = vector.broadcast %cst_56 : f32 to vector<8x32xf32>
    %173 = arith.addf %172, %171 : vector<8x32xf32>
    %174 = arith.divf %172, %173 : vector<8x32xf32>
    %175 = vector.extract_strided_slice %166 {offsets = [0, 32], sizes = [8, 32], strides = [1, 1]} : vector<8x96xf32> to vector<8x32xf32>
    %176 = vector.extract_strided_slice %163 {offsets = [0, 32], sizes = [8, 32], strides = [1, 1]} : vector<8x96xf32> to vector<8x32xf32>
    %177 = arith.addf %175, %176 : vector<8x32xf32>
    %178 = arith.negf %177 : vector<8x32xf32>
    %179 = math.exp %178 : vector<8x32xf32>
    %cst_57 = arith.constant 1.000000e+00 : f32
    %180 = vector.broadcast %cst_57 : f32 to vector<8x32xf32>
    %181 = arith.addf %180, %179 : vector<8x32xf32>
    %182 = arith.divf %180, %181 : vector<8x32xf32>
    %183 = vector.extract_strided_slice %166 {offsets = [0, 64], sizes = [8, 32], strides = [1, 1]} : vector<8x96xf32> to vector<8x32xf32>
    %184 = vector.extract_strided_slice %163 {offsets = [0, 64], sizes = [8, 32], strides = [1, 1]} : vector<8x96xf32> to vector<8x32xf32>
    %185 = vector.broadcast %17 : vector<1x32xf32> to vector<8x32xf32>
    %186 = arith.addf %184, %185 : vector<8x32xf32>
    %187 = arith.mulf %174, %186 : vector<8x32xf32>
    %188 = arith.addf %183, %187 : vector<8x32xf32>
    %189 = math.tanh %188 : vector<8x32xf32>
    %cst_58 = arith.constant 1.000000e+00 : f32
    %190 = vector.broadcast %cst_58 : f32 to vector<8x32xf32>
    %191 = arith.subf %190, %182 : vector<8x32xf32>
    %192 = arith.mulf %191, %189 : vector<8x32xf32>
    %193 = arith.mulf %182, %158 : vector<8x32xf32>
    %194 = arith.addf %192, %193 : vector<8x32xf32>
    %195 = arith.index_cast %c4_i32 : i32 to index
    %c0_59 = arith.constant 0 : index
    %c0_60 = arith.constant 0 : index
    %196 = vector.load %arg13[%195, %c0_59, %c0_60] : memref<8x8x32xf32, #tpu.memory_space<vmem>>, vector<1x8x32xf32>
    %197 = vector.shape_cast %196 : vector<1x8x32xf32> to vector<8x32xf32>
    %198 = vector.shape_cast %194 : vector<8x32xf32> to vector<1x8x32xf32>
    tpu.vector_store %arg13[%195, %c0_59, %c0_60], %198 {strides = array<i32>} : memref<8x8x32xf32, #tpu.memory_space<vmem>>, vector<1x8x32xf32>,
    %c5_i32 = arith.constant 5 : i32
    %cst_61 = arith.constant dense<0.000000e+00> : vector<8x96xf32>
    %199 = tpu.matmul %194, %16, %cst_61 {dimension_numbers = #tpu.dot_dimension_numbers<[1], [0], [0], [1], [0, 0, 1, 1], [], []>} : vector<8x32xf32>, vector<32x96xf32>, vector<8x96xf32> -> vector<8x96xf32>
    %200 = arith.index_cast %c5_i32 : i32 to index
    %c0_62 = arith.constant 0 : index
    %c0_63 = arith.constant 0 : index
    %201 = vector.load %arg16[%200, %c0_62, %c0_63] : memref<8x8x96xf32, #tpu.memory_space<vmem>>, vector<1x8x96xf32>
    %202 = vector.shape_cast %201 : vector<1x8x96xf32> to vector<8x96xf32>
    %203 = vector.extract_strided_slice %202 {offsets = [0, 0], sizes = [8, 32], strides = [1, 1]} : vector<8x96xf32> to vector<8x32xf32>
    %204 = vector.extract_strided_slice %199 {offsets = [0, 0], sizes = [8, 32], strides = [1, 1]} : vector<8x96xf32> to vector<8x32xf32>
    %205 = arith.addf %203, %204 : vector<8x32xf32>
    %206 = arith.negf %205 : vector<8x32xf32>
    %207 = math.exp %206 : vector<8x32xf32>
    %cst_64 = arith.constant 1.000000e+00 : f32
    %208 = vector.broadcast %cst_64 : f32 to vector<8x32xf32>
    %209 = arith.addf %208, %207 : vector<8x32xf32>
    %210 = arith.divf %208, %209 : vector<8x32xf32>
    %211 = vector.extract_strided_slice %202 {offsets = [0, 32], sizes = [8, 32], strides = [1, 1]} : vector<8x96xf32> to vector<8x32xf32>
    %212 = vector.extract_strided_slice %199 {offsets = [0, 32], sizes = [8, 32], strides = [1, 1]} : vector<8x96xf32> to vector<8x32xf32>
    %213 = arith.addf %211, %212 : vector<8x32xf32>
    %214 = arith.negf %213 : vector<8x32xf32>
    %215 = math.exp %214 : vector<8x32xf32>
    %cst_65 = arith.constant 1.000000e+00 : f32
    %216 = vector.broadcast %cst_65 : f32 to vector<8x32xf32>
    %217 = arith.addf %216, %215 : vector<8x32xf32>
    %218 = arith.divf %216, %217 : vector<8x32xf32>
    %219 = vector.extract_strided_slice %202 {offsets = [0, 64], sizes = [8, 32], strides = [1, 1]} : vector<8x96xf32> to vector<8x32xf32>
    %220 = vector.extract_strided_slice %199 {offsets = [0, 64], sizes = [8, 32], strides = [1, 1]} : vector<8x96xf32> to vector<8x32xf32>
    %221 = vector.broadcast %17 : vector<1x32xf32> to vector<8x32xf32>
    %222 = arith.addf %220, %221 : vector<8x32xf32>
    %223 = arith.mulf %210, %222 : vector<8x32xf32>
    %224 = arith.addf %219, %223 : vector<8x32xf32>
    %225 = math.tanh %224 : vector<8x32xf32>
    %cst_66 = arith.constant 1.000000e+00 : f32
    %226 = vector.broadcast %cst_66 : f32 to vector<8x32xf32>
    %227 = arith.subf %226, %218 : vector<8x32xf32>
    %228 = arith.mulf %227, %225 : vector<8x32xf32>
    %229 = arith.mulf %218, %194 : vector<8x32xf32>
    %230 = arith.addf %228, %229 : vector<8x32xf32>
    %231 = arith.index_cast %c5_i32 : i32 to index
    %c0_67 = arith.constant 0 : index
    %c0_68 = arith.constant 0 : index
    %232 = vector.load %arg13[%231, %c0_67, %c0_68] : memref<8x8x32xf32, #tpu.memory_space<vmem>>, vector<1x8x32xf32>
    %233 = vector.shape_cast %232 : vector<1x8x32xf32> to vector<8x32xf32>
    %234 = vector.shape_cast %230 : vector<8x32xf32> to vector<1x8x32xf32>
    tpu.vector_store %arg13[%231, %c0_67, %c0_68], %234 {strides = array<i32>} : memref<8x8x32xf32, #tpu.memory_space<vmem>>, vector<1x8x32xf32>,
    %c6_i32 = arith.constant 6 : i32
    %cst_69 = arith.constant dense<0.000000e+00> : vector<8x96xf32>
    %235 = tpu.matmul %230, %16, %cst_69 {dimension_numbers = #tpu.dot_dimension_numbers<[1], [0], [0], [1], [0, 0, 1, 1], [], []>} : vector<8x32xf32>, vector<32x96xf32>, vector<8x96xf32> -> vector<8x96xf32>
    %236 = arith.index_cast %c6_i32 : i32 to index
    %c0_70 = arith.constant 0 : index
    %c0_71 = arith.constant 0 : index
    %237 = vector.load %arg16[%236, %c0_70, %c0_71] : memref<8x8x96xf32, #tpu.memory_space<vmem>>, vector<1x8x96xf32>
    %238 = vector.shape_cast %237 : vector<1x8x96xf32> to vector<8x96xf32>
    %239 = vector.extract_strided_slice %238 {offsets = [0, 0], sizes = [8, 32], strides = [1, 1]} : vector<8x96xf32> to vector<8x32xf32>
    %240 = vector.extract_strided_slice %235 {offsets = [0, 0], sizes = [8, 32], strides = [1, 1]} : vector<8x96xf32> to vector<8x32xf32>
    %241 = arith.addf %239, %240 : vector<8x32xf32>
    %242 = arith.negf %241 : vector<8x32xf32>
    %243 = math.exp %242 : vector<8x32xf32>
    %cst_72 = arith.constant 1.000000e+00 : f32
    %244 = vector.broadcast %cst_72 : f32 to vector<8x32xf32>
    %245 = arith.addf %244, %243 : vector<8x32xf32>
    %246 = arith.divf %244, %245 : vector<8x32xf32>
    %247 = vector.extract_strided_slice %238 {offsets = [0, 32], sizes = [8, 32], strides = [1, 1]} : vector<8x96xf32> to vector<8x32xf32>
    %248 = vector.extract_strided_slice %235 {offsets = [0, 32], sizes = [8, 32], strides = [1, 1]} : vector<8x96xf32> to vector<8x32xf32>
    %249 = arith.addf %247, %248 : vector<8x32xf32>
    %250 = arith.negf %249 : vector<8x32xf32>
    %251 = math.exp %250 : vector<8x32xf32>
    %cst_73 = arith.constant 1.000000e+00 : f32
    %252 = vector.broadcast %cst_73 : f32 to vector<8x32xf32>
    %253 = arith.addf %252, %251 : vector<8x32xf32>
    %254 = arith.divf %252, %253 : vector<8x32xf32>
    %255 = vector.extract_strided_slice %238 {offsets = [0, 64], sizes = [8, 32], strides = [1, 1]} : vector<8x96xf32> to vector<8x32xf32>
    %256 = vector.extract_strided_slice %235 {offsets = [0, 64], sizes = [8, 32], strides = [1, 1]} : vector<8x96xf32> to vector<8x32xf32>
    %257 = vector.broadcast %17 : vector<1x32xf32> to vector<8x32xf32>
    %258 = arith.addf %256, %257 : vector<8x32xf32>
    %259 = arith.mulf %246, %258 : vector<8x32xf32>
    %260 = arith.addf %255, %259 : vector<8x32xf32>
    %261 = math.tanh %260 : vector<8x32xf32>
    %cst_74 = arith.constant 1.000000e+00 : f32
    %262 = vector.broadcast %cst_74 : f32 to vector<8x32xf32>
    %263 = arith.subf %262, %254 : vector<8x32xf32>
    %264 = arith.mulf %263, %261 : vector<8x32xf32>
    %265 = arith.mulf %254, %230 : vector<8x32xf32>
    %266 = arith.addf %264, %265 : vector<8x32xf32>
    %267 = arith.index_cast %c6_i32 : i32 to index
    %c0_75 = arith.constant 0 : index
    %c0_76 = arith.constant 0 : index
    %268 = vector.load %arg13[%267, %c0_75, %c0_76] : memref<8x8x32xf32, #tpu.memory_space<vmem>>, vector<1x8x32xf32>
    %269 = vector.shape_cast %268 : vector<1x8x32xf32> to vector<8x32xf32>
    %270 = vector.shape_cast %266 : vector<8x32xf32> to vector<1x8x32xf32>
    tpu.vector_store %arg13[%267, %c0_75, %c0_76], %270 {strides = array<i32>} : memref<8x8x32xf32, #tpu.memory_space<vmem>>, vector<1x8x32xf32>,
    %c7_i32 = arith.constant 7 : i32
    %cst_77 = arith.constant dense<0.000000e+00> : vector<8x96xf32>
    %271 = tpu.matmul %266, %16, %cst_77 {dimension_numbers = #tpu.dot_dimension_numbers<[1], [0], [0], [1], [0, 0, 1, 1], [], []>} : vector<8x32xf32>, vector<32x96xf32>, vector<8x96xf32> -> vector<8x96xf32>
    %272 = arith.index_cast %c7_i32 : i32 to index
    %c0_78 = arith.constant 0 : index
    %c0_79 = arith.constant 0 : index
    %273 = vector.load %arg16[%272, %c0_78, %c0_79] : memref<8x8x96xf32, #tpu.memory_space<vmem>>, vector<1x8x96xf32>
    %274 = vector.shape_cast %273 : vector<1x8x96xf32> to vector<8x96xf32>
    %275 = vector.extract_strided_slice %274 {offsets = [0, 0], sizes = [8, 32], strides = [1, 1]} : vector<8x96xf32> to vector<8x32xf32>
    %276 = vector.extract_strided_slice %271 {offsets = [0, 0], sizes = [8, 32], strides = [1, 1]} : vector<8x96xf32> to vector<8x32xf32>
    %277 = arith.addf %275, %276 : vector<8x32xf32>
    %278 = arith.negf %277 : vector<8x32xf32>
    %279 = math.exp %278 : vector<8x32xf32>
    %cst_80 = arith.constant 1.000000e+00 : f32
    %280 = vector.broadcast %cst_80 : f32 to vector<8x32xf32>
    %281 = arith.addf %280, %279 : vector<8x32xf32>
    %282 = arith.divf %280, %281 : vector<8x32xf32>
    %283 = vector.extract_strided_slice %274 {offsets = [0, 32], sizes = [8, 32], strides = [1, 1]} : vector<8x96xf32> to vector<8x32xf32>
    %284 = vector.extract_strided_slice %271 {offsets = [0, 32], sizes = [8, 32], strides = [1, 1]} : vector<8x96xf32> to vector<8x32xf32>
    %285 = arith.addf %283, %284 : vector<8x32xf32>
    %286 = arith.negf %285 : vector<8x32xf32>
    %287 = math.exp %286 : vector<8x32xf32>
    %cst_81 = arith.constant 1.000000e+00 : f32
    %288 = vector.broadcast %cst_81 : f32 to vector<8x32xf32>
    %289 = arith.addf %288, %287 : vector<8x32xf32>
    %290 = arith.divf %288, %289 : vector<8x32xf32>
    %291 = vector.extract_strided_slice %274 {offsets = [0, 64], sizes = [8, 32], strides = [1, 1]} : vector<8x96xf32> to vector<8x32xf32>
    %292 = vector.extract_strided_slice %271 {offsets = [0, 64], sizes = [8, 32], strides = [1, 1]} : vector<8x96xf32> to vector<8x32xf32>
    %293 = vector.broadcast %17 : vector<1x32xf32> to vector<8x32xf32>
    %294 = arith.addf %292, %293 : vector<8x32xf32>
    %295 = arith.mulf %282, %294 : vector<8x32xf32>
    %296 = arith.addf %291, %295 : vector<8x32xf32>
    %297 = math.tanh %296 : vector<8x32xf32>
    %cst_82 = arith.constant 1.000000e+00 : f32
    %298 = vector.broadcast %cst_82 : f32 to vector<8x32xf32>
    %299 = arith.subf %298, %290 : vector<8x32xf32>
    %300 = arith.mulf %299, %297 : vector<8x32xf32>
    %301 = arith.mulf %290, %266 : vector<8x32xf32>
    %302 = arith.addf %300, %301 : vector<8x32xf32>
    %303 = arith.index_cast %c7_i32 : i32 to index
    %c0_83 = arith.constant 0 : index
    %c0_84 = arith.constant 0 : index
    %304 = vector.load %arg13[%303, %c0_83, %c0_84] : memref<8x8x32xf32, #tpu.memory_space<vmem>>, vector<1x8x32xf32>
    %305 = vector.shape_cast %304 : vector<1x8x32xf32> to vector<8x32xf32>
    %306 = vector.shape_cast %302 : vector<8x32xf32> to vector<1x8x32xf32>
    tpu.vector_store %arg13[%303, %c0_83, %c0_84], %306 {strides = array<i32>} : memref<8x8x32xf32, #tpu.memory_space<vmem>>, vector<1x8x32xf32>,
    %c8_i32 = arith.constant 8 : i32
    %c0_85 = arith.constant 0 : index
    %c0_86 = arith.constant 0 : index
    %c0_87 = arith.constant 0 : index
    %307 = vector.load %arg13[%c0_85, %c0_86, %c0_87] : memref<8x8x32xf32, #tpu.memory_space<vmem>>, vector<8x8x32xf32>
    %308 = vector.shape_cast %307 : vector<8x8x32xf32> to vector<64x32xf32>
    %c0_88 = arith.constant 0 : index
    %c0_89 = arith.constant 0 : index
    %309 = vector.load %arg11[%c0_88, %c0_89] : memref<32x128xf32, #tpu.memory_space<vmem>>, vector<32x128xf32>
    %cst_90 = arith.constant dense<0.000000e+00> : vector<64x128xf32>
    %310 = tpu.matmul %308, %309, %cst_90 {dimension_numbers = #tpu.dot_dimension_numbers<[1], [0], [0], [1], [0, 0, 1, 1], [], []>} : vector<64x32xf32>, vector<32x128xf32>, vector<64x128xf32> -> vector<64x128xf32>
    %c0_91 = arith.constant 0 : index
    %c0_92 = arith.constant 0 : index
    %311 = vector.load %arg12[%c0_91, %c0_92] : memref<1x128xf32, #tpu.memory_space<vmem>>, vector<1x128xf32>
    %312 = vector.broadcast %311 : vector<1x128xf32> to vector<64x128xf32>
    %313 = arith.addf %310, %312 : vector<64x128xf32>
    %c0_93 = arith.constant 0 : index
    %c0_94 = arith.constant 0 : index
    %314 = vector.load %arg9[%c0_93, %c0_94] : memref<32x128xf32, #tpu.memory_space<vmem>>, vector<32x128xf32>
    %cst_95 = arith.constant dense<0.000000e+00> : vector<64x128xf32>
    %315 = tpu.matmul %308, %314, %cst_95 {dimension_numbers = #tpu.dot_dimension_numbers<[1], [0], [0], [1], [0, 0, 1, 1], [], []>} : vector<64x32xf32>, vector<32x128xf32>, vector<64x128xf32> -> vector<64x128xf32>
    %c0_96 = arith.constant 0 : index
    %c0_97 = arith.constant 0 : index
    %316 = vector.load %arg10[%c0_96, %c0_97] : memref<1x128xf32, #tpu.memory_space<vmem>>, vector<1x128xf32>
    %317 = vector.broadcast %316 : vector<1x128xf32> to vector<64x128xf32>
    %318 = arith.addf %315, %317 : vector<64x128xf32>
    %319 = vector.shape_cast %318 : vector<64x128xf32> to vector<8x8x128xf32>
    %c0_98 = arith.constant 0 : index
    %c0_99 = arith.constant 0 : index
    %c0_100 = arith.constant 0 : index
    %320 = vector.load %arg14[%c0_98, %c0_99, %c0_100] : memref<8x8x128xf32, #tpu.memory_space<vmem>>, vector<8x8x128xf32>
    tpu.vector_store %arg14[%c0_98, %c0_99, %c0_100], %319 {strides = array<i32>} : memref<8x8x128xf32, #tpu.memory_space<vmem>>, vector<8x8x128xf32>,
    %321 = vector.shape_cast %313 : vector<64x128xf32> to vector<8x8x128xf32>
    %c0_101 = arith.constant 0 : index
    %c0_102 = arith.constant 0 : index
    %c0_103 = arith.constant 0 : index
    %322 = vector.load %arg15[%c0_101, %c0_102, %c0_103] : memref<8x8x128xf32, #tpu.memory_space<vmem>>, vector<8x8x128xf32>
    tpu.vector_store %arg15[%c0_101, %c0_102, %c0_103], %321 {strides = array<i32>} : memref<8x8x128xf32, #tpu.memory_space<vmem>>, vector<8x8x128xf32>,
    return
  }
  func.func @transform_0(%arg0: i32) -> (i32, i32, i32) {
    %c0_i32 = arith.constant 0 : i32
    %c0_i32_0 = arith.constant 0 : i32
    %c0_i32_1 = arith.constant 0 : i32
    return %c0_i32, %arg0, %c0_i32_0 : i32, i32, i32
  }
  func.func @transform_1(%arg0: i32) -> (i32, i32) {
    %c0_i32 = arith.constant 0 : i32
    %c0_i32_0 = arith.constant 0 : i32
    return %arg0, %c0_i32 : i32, i32
  }
  func.func @transform_2(%arg0: i32) -> (i32, i32) {
    %c0_i32 = arith.constant 0 : i32
    %c0_i32_0 = arith.constant 0 : i32
    %c0_i32_1 = arith.constant 0 : i32
    return %c0_i32, %c0_i32_0 : i32, i32
  }
  func.func @transform_3(%arg0: i32) -> (i32, i32) {
    %c0_i32 = arith.constant 0 : i32
    %c0_i32_0 = arith.constant 0 : i32
    %c0_i32_1 = arith.constant 0 : i32
    return %c0_i32, %c0_i32_0 : i32, i32
  }
  func.func @transform_4(%arg0: i32) -> (i32, i32) {
    %c0_i32 = arith.constant 0 : i32
    %c0_i32_0 = arith.constant 0 : i32
    %c0_i32_1 = arith.constant 0 : i32
    return %c0_i32, %c0_i32_0 : i32, i32
  }
  func.func @transform_5(%arg0: i32) -> (i32, i32) {
    %c0_i32 = arith.constant 0 : i32
    %c0_i32_0 = arith.constant 0 : i32
    %c0_i32_1 = arith.constant 0 : i32
    return %c0_i32, %c0_i32_0 : i32, i32
  }
  func.func @transform_6(%arg0: i32) -> (i32, i32) {
    %c0_i32 = arith.constant 0 : i32
    %c0_i32_0 = arith.constant 0 : i32
    %c0_i32_1 = arith.constant 0 : i32
    return %c0_i32, %c0_i32_0 : i32, i32
  }
  func.func @transform_7(%arg0: i32) -> (i32, i32) {
    %c0_i32 = arith.constant 0 : i32
    %c0_i32_0 = arith.constant 0 : i32
    %c0_i32_1 = arith.constant 0 : i32
    return %c0_i32, %c0_i32_0 : i32, i32
  }
  func.func @transform_8(%arg0: i32) -> (i32, i32) {
    %c0_i32 = arith.constant 0 : i32
    %c0_i32_0 = arith.constant 0 : i32
    %c0_i32_1 = arith.constant 0 : i32
    return %c0_i32, %c0_i32_0 : i32, i32
  }
  func.func @transform_9(%arg0: i32) -> (i32, i32) {
    %c0_i32 = arith.constant 0 : i32
    %c0_i32_0 = arith.constant 0 : i32
    %c0_i32_1 = arith.constant 0 : i32
    return %c0_i32, %c0_i32_0 : i32, i32
  }
  func.func @transform_10(%arg0: i32) -> (i32, i32) {
    %c0_i32 = arith.constant 0 : i32
    %c0_i32_0 = arith.constant 0 : i32
    %c0_i32_1 = arith.constant 0 : i32
    return %c0_i32, %c0_i32_0 : i32, i32
  }
  func.func @transform_11(%arg0: i32) -> (i32, i32) {
    %c0_i32 = arith.constant 0 : i32
    %c0_i32_0 = arith.constant 0 : i32
    %c0_i32_1 = arith.constant 0 : i32
    return %c0_i32, %c0_i32_0 : i32, i32
  }
  func.func @transform_12(%arg0: i32) -> (i32, i32, i32) {
    %c0_i32 = arith.constant 0 : i32
    %c0_i32_0 = arith.constant 0 : i32
    %c0_i32_1 = arith.constant 0 : i32
    return %c0_i32, %arg0, %c0_i32_0 : i32, i32, i32
  }
  func.func @transform_13(%arg0: i32) -> (i32, i32, i32) {
    %c0_i32 = arith.constant 0 : i32
    %c0_i32_0 = arith.constant 0 : i32
    %c0_i32_1 = arith.constant 0 : i32
    return %c0_i32, %arg0, %c0_i32_0 : i32, i32, i32
  }
  func.func @transform_14(%arg0: i32) -> (i32, i32, i32) {
    %c0_i32 = arith.constant 0 : i32
    %c0_i32_0 = arith.constant 0 : i32
    %c0_i32_1 = arith.constant 0 : i32
    return %c0_i32, %arg0, %c0_i32_0 : i32, i32, i32
  }
}

</mosaic_0001>

<llo_original>
// kernel: tpu_custom_call.1
$region0: #{tpu_custom_call.1}
  #allocation0 [shape = 'u32[]', space=smem, size = 0x4, offset = 0x4, fixed_abs, tag = 'smem constant byte address 0x4 - core index']
  #allocation1 [shape = 'u32[144,128]{1,0:T(1,128)}', space=vmem, size = 0x12000, scoped, tag = 'internal scratch']
  #allocation2 [shape = 'f32[8,8,96]{2,1,0:T(8,128)}', space=vmem, size = 0x8000, scoped, tag = 'scratch operand']
  %s0 = inlined_call_operand.hbm [shape: f32[8,8,10], index: 0, kind: input, shape index: {}]
  %s1 = inlined_call_operand.hbm [shape: f32[8,32], index: 1, kind: input, shape index: {}]
  %s2 = inlined_call_operand.hbm [shape: f32[10,32], index: 2, kind: input, shape index: {}]
  %s3 = inlined_call_operand.vmem [shape: f32[1,32], index: 3, kind: input, shape index: {}]
  %s4 = inlined_call_operand.hbm [shape: f32[32,96], index: 4, kind: input, shape index: {}]
  %s5 = inlined_call_operand.vmem [shape: f32[1,96], index: 5, kind: input, shape index: {}]
  %s6 = inlined_call_operand.hbm [shape: f32[32,96], index: 6, kind: input, shape index: {}]
  %s7 = inlined_call_operand.vmem [shape: f32[1,32], index: 7, kind: input, shape index: {}]
  %s8 = inlined_call_operand.hbm [shape: f32[32,128], index: 8, kind: input, shape index: {}]
  %s9 = inlined_call_operand.vmem [shape: f32[1,128], index: 9, kind: input, shape index: {}]
  %s10 = inlined_call_operand.vmem [shape: f32[32,128], index: 10, kind: input, shape index: {}]
  %s11 = inlined_call_operand.vmem [shape: f32[1,128], index: 11, kind: input, shape index: {}]
  %s12 = inlined_call_operand.hbm [shape: f32[8,8,32], index: 12, kind: output, shape index: {0}]
  %s13 = inlined_call_operand.hbm [shape: f32[8,8,128], index: 13, kind: output, shape index: {1}]
  %s14 = inlined_call_operand.hbm [shape: f32[8,8,128], index: 14, kind: output, shape index: {2}]
  %15 = xla_tuple %s12, %s13, %s14
  %s16 = sld [smem:[#allocation0]]
  $region98: #{tpu_custom_call.1} parent=0
    _
  %s18 = ssub.s32 1, %s16
  %s19 = scalar_select 0, %s18, %s16
  $region1: #{tpu_custom_call.1} parent=0
    #allocation3 [shape = 'u8[32768]{0}', space=vmem, size = 0x8000, scoped, tag = 'input window, operand 0, single buffered']
    #allocation4 [shape = 's32[1]{0}', space=sflag, size = 0x4, scoped, tag = 'scoped memory for tpu_custom_call.1']
    #allocation5 [shape = 's32[1]{0}', space=sflag, size = 0x4, scoped, tag = 'scoped memory for tpu_custom_call.1']
    #allocation6 [shape = 'u8[4096]{0}', space=vmem, size = 0x1000, scoped, tag = 'input window, operand 1, single buffered']
    #allocation7 [shape = 's32[1]{0}', space=sflag, size = 0x4, scoped, tag = 'scoped memory for tpu_custom_call.1']
    #allocation8 [shape = 'u8[8192]{0}', space=vmem, size = 0x2000, scoped, tag = 'input window, operand 2, single buffered']
    #allocation9 [shape = 'u8[16384]{0}', space=vmem, size = 0x4000, scoped, tag = 'input window, operand 4, single buffered']
    #allocation10 [shape = 's32[1]{0}', space=sflag, size = 0x4, scoped, tag = 'scoped memory for tpu_custom_call.1']
    #allocation11 [shape = 'u8[16384]{0}', space=vmem, size = 0x4000, scoped, tag = 'input window, operand 6, single buffered']
    #allocation12 [shape = 'u8[16384]{0}', space=vmem, size = 0x4000, scoped, tag = 'input window, operand 8, single buffered']
    #allocation13 [shape = 's32[1]{0}', space=sflag, size = 0x4, scoped, tag = 'scoped memory for tpu_custom_call.1']
    #allocation14 [shape = 'u8[32768]{0}', space=vmem, size = 0x8000, scoped, tag = 'output window, operand 0, single buffered']
    #allocation15 [shape = 'u8[32768]{0}', space=vmem, size = 0x8000, scoped, tag = 'output window, operand 1, single buffered']
    #allocation16 [shape = 's32[1]{0}', space=sflag, size = 0x4, scoped, tag = 'scoped memory for tpu_custom_call.1']
    #allocation17 [shape = 'u8[32768]{0}', space=vmem, size = 0x8000, scoped, tag = 'output window, operand 2, single buffered']
    %20 = vsyncpa [#allocation4], 0
    %21 = vsyncpa [#allocation7], 0
    %22 = vsyncpa [#allocation10], 0
    %23 = vsyncpa [#allocation13], 0
    %24 = vsyncpa [#allocation5], 0
    %25 = vsyncpa [#allocation16], 0
    // Predicated region
    $region2: #{tpu_custom_call.1} parent=1 // pred_check
      _
    $region3: #{tpu_custom_call.1} parent=1 // pred_check_branch
      %27 = sbr.rel (0) target = $region5
    $region4: #{tpu_custom_call.1} parent=1 // pred_region
      %s29 = ssub.s32 1024, 1024
      %30 = vsyncadd [#allocation4], %s29
      %s31 = sshll.u32 [#allocation3], 4
      %s32 = int_to_ptr.vmem [resolvable:$true] %s31
      %37 = dma.hbm_to_vmem [thread:$0]  %s0, 1024, %s32, [#allocation4], 128, 128, 8
    $region5: #{tpu_custom_call.1} parent=1 // pred_fallthru
      _
    // Predicated region
    $region6: #{tpu_custom_call.1} parent=1 // pred_check
      _
    $region7: #{tpu_custom_call.1} parent=1 // pred_check_branch
      %39 = sbr.rel (0) target = $region9
    $region8: #{tpu_custom_call.1} parent=1 // pred_region
      %s41 = ssub.s32 128, 128
      %42 = vsyncadd [#allocation7], %s41
      %s44 = sshll.u32 [#allocation6], 4
      %s45 = int_to_ptr.vmem [resolvable:$true] %s44
      %47 = dma.hbm_to_vmem [thread:$0]  %s1, 128, %s45, [#allocation7]
    $region9: #{tpu_custom_call.1} parent=1 // pred_fallthru
      _
    // Predicated region
    $region10: #{tpu_custom_call.1} parent=1 // pred_check
      _
    $region11: #{tpu_custom_call.1} parent=1 // pred_check_branch
      %49 = sbr.rel (0) target = $region13
    $region12: #{tpu_custom_call.1} parent=1 // pred_region
      %s51 = ssub.s32 256, 256
      %52 = vsyncadd [#allocation7], %s51
      %s53 = sshll.u32 [#allocation8], 4
      %s54 = int_to_ptr.vmem [resolvable:$true] %s53
      %59 = dma.hbm_to_vmem [thread:$0]  %s2, 256, %s54, [#allocation7], 128, 128, 8
    $region13: #{tpu_custom_call.1} parent=1 // pred_fallthru
      _
    // Predicated region
    $region14: #{tpu_custom_call.1} parent=1 // pred_check
      _
    $region15: #{tpu_custom_call.1} parent=1 // pred_check_branch
      %61 = sbr.rel (0) target = $region17
    $region16: #{tpu_custom_call.1} parent=1 // pred_region
      _
    $region17: #{tpu_custom_call.1} parent=1 // pred_fallthru
      _
    // Predicated region
    $region18: #{tpu_custom_call.1} parent=1 // pred_check
      _
    $region19: #{tpu_custom_call.1} parent=1 // pred_check_branch
      %63 = sbr.rel (0) target = $region21
    $region20: #{tpu_custom_call.1} parent=1 // pred_region
      %s65 = ssub.s32 512, 512
      %66 = vsyncadd [#allocation10], %s65
      %s67 = sshll.u32 [#allocation9], 4
      %s68 = int_to_ptr.vmem [resolvable:$true] %s67
      %73 = dma.hbm_to_vmem [thread:$0]  %s4, 512, %s68, [#allocation10], 128, 128, 8
    $region21: #{tpu_custom_call.1} parent=1 // pred_fallthru
      _
    // Predicated region
    $region22: #{tpu_custom_call.1} parent=1 // pred_check
      _
    $region23: #{tpu_custom_call.1} parent=1 // pred_check_branch
      %75 = sbr.rel (0) target = $region25
    $region24: #{tpu_custom_call.1} parent=1 // pred_region
      _
    $region25: #{tpu_custom_call.1} parent=1 // pred_fallthru
      _
    // Predicated region
    $region26: #{tpu_custom_call.1} parent=1 // pred_check
      _
    $region27: #{tpu_custom_call.1} parent=1 // pred_check_branch
      %77 = sbr.rel (0) target = $region29
    $region28: #{tpu_custom_call.1} parent=1 // pred_region
      %s79 = ssub.s32 512, 512
      %80 = vsyncadd [#allocation10], %s79
      %s81 = sshll.u32 [#allocation11], 4
      %s82 = int_to_ptr.vmem [resolvable:$true] %s81
      %87 = dma.hbm_to_vmem [thread:$0]  %s6, 512, %s82, [#allocation10], 128, 128, 8
    $region29: #{tpu_custom_call.1} parent=1 // pred_fallthru
      _
    // Predicated region
    $region30: #{tpu_custom_call.1} parent=1 // pred_check
      _
    $region31: #{tpu_custom_call.1} parent=1 // pred_check_branch
      %89 = sbr.rel (0) target = $region33
    $region32: #{tpu_custom_call.1} parent=1 // pred_region
      _
    $region33: #{tpu_custom_call.1} parent=1 // pred_fallthru
      _
    // Predicated region
    $region34: #{tpu_custom_call.1} parent=1 // pred_check
      _
    $region35: #{tpu_custom_call.1} parent=1 // pred_check_branch
      %91 = sbr.rel (0) target = $region37
    $region36: #{tpu_custom_call.1} parent=1 // pred_region
      %s93 = ssub.s32 512, 512
      %94 = vsyncadd [#allocation13], %s93
      %s95 = sshll.u32 [#allocation12], 4
      %s96 = int_to_ptr.vmem [resolvable:$true] %s95
      %101 = dma.hbm_to_vmem [thread:$0]  %s8, 512, %s96, [#allocation13], 128, 128, 8
    $region37: #{tpu_custom_call.1} parent=1 // pred_fallthru
      _
    // Predicated region
    $region38: #{tpu_custom_call.1} parent=1 // pred_check
      _
    $region39: #{tpu_custom_call.1} parent=1 // pred_check_branch
      %103 = sbr.rel (0) target = $region41
    $region40: #{tpu_custom_call.1} parent=1 // pred_region
      _
    $region41: #{tpu_custom_call.1} parent=1 // pred_fallthru
      _
    // Predicated region
    $region42: #{tpu_custom_call.1} parent=1 // pred_check
      _
    $region43: #{tpu_custom_call.1} parent=1 // pred_check_branch
      %105 = sbr.rel (0) target = $region45
    $region44: #{tpu_custom_call.1} parent=1 // pred_region
      _
    $region45: #{tpu_custom_call.1} parent=1 // pred_fallthru
      _
    // Predicated region
    $region46: #{tpu_custom_call.1} parent=1 // pred_check
      _
    $region47: #{tpu_custom_call.1} parent=1 // pred_check_branch
      %107 = sbr.rel (0) target = $region49
    $region48: #{tpu_custom_call.1} parent=1 // pred_region
      _
    $region49: #{tpu_custom_call.1} parent=1 // pred_fallthru
      _
    // Predicated region
    $region50: #{tpu_custom_call.1} parent=1 // pred_check
      _
    $region51: #{tpu_custom_call.1} parent=1 // pred_check_branch
      %109 = sbr.rel (0) target = $region53
    $region52: #{tpu_custom_call.1} parent=1 // pred_region
      %110 = dma.done [#allocation4], 1024
    $region53: #{tpu_custom_call.1} parent=1 // pred_fallthru
      _
    // Predicated region
    $region54: #{tpu_custom_call.1} parent=1 // pred_check
      _
    $region55: #{tpu_custom_call.1} parent=1 // pred_check_branch
      %112 = sbr.rel (0) target = $region57
    $region56: #{tpu_custom_call.1} parent=1 // pred_region
      %113 = dma.done [#allocation7], 128
    $region57: #{tpu_custom_call.1} parent=1 // pred_fallthru
      _
    // Predicated region
    $region58: #{tpu_custom_call.1} parent=1 // pred_check
      _
    $region59: #{tpu_custom_call.1} parent=1 // pred_check_branch
      %115 = sbr.rel (0) target = $region61
    $region60: #{tpu_custom_call.1} parent=1 // pred_region
      %116 = dma.done [#allocation7], 256
    $region61: #{tpu_custom_call.1} parent=1 // pred_fallthru
      _
    // Predicated region
    $region62: #{tpu_custom_call.1} parent=1 // pred_check
      _
    $region63: #{tpu_custom_call.1} parent=1 // pred_check_branch
      %118 = sbr.rel (0) target = $region65
    $region64: #{tpu_custom_call.1} parent=1 // pred_region
      %119 = dma.done [#allocation10], 512
    $region65: #{tpu_custom_call.1} parent=1 // pred_fallthru
      _
    // Predicated region
    $region66: #{tpu_custom_call.1} parent=1 // pred_check
      _
    $region67: #{tpu_custom_call.1} parent=1 // pred_check_branch
      %121 = sbr.rel (0) target = $region69
    $region68: #{tpu_custom_call.1} parent=1 // pred_region
      %122 = dma.done [#allocation10], 512
    $region69: #{tpu_custom_call.1} parent=1 // pred_fallthru
      _
    // Predicated region
    $region70: #{tpu_custom_call.1} parent=1 // pred_check
      _
    $region71: #{tpu_custom_call.1} parent=1 // pred_check_branch
      %124 = sbr.rel (0) target = $region73
    $region72: #{tpu_custom_call.1} parent=1 // pred_region
      %125 = dma.done [#allocation13], 512
    $region73: #{tpu_custom_call.1} parent=1 // pred_fallthru
      _
    %v126 = vld [vmem:[#allocation3] sm:$0xff]
    %v127 = vld [vmem:[#allocation3 + $0x8] sm:$0xff]
    %v128 = vld [vmem:[#allocation3 + $0x10] sm:$0xff]
    %v129 = vld [vmem:[#allocation3 + $0x18] sm:$0xff]
    %v130 = vld [vmem:[#allocation3 + $0x20] sm:$0xff]
    %v131 = vld [vmem:[#allocation3 + $0x28] sm:$0xff]
    %v132 = vld [vmem:[#allocation3 + $0x30] sm:$0xff]
    %v133 = vld [vmem:[#allocation3 + $0x38] sm:$0xff]
    %v134 = vld [vmem:[#allocation8] sm:$0xff]
    %v135 = vld [vmem:[#allocation8 + $0x8] sm:$0x3]
    %v136 = vld [vmem:[%s3] sm:$0x1]
    %v138 = vlaneseq
    %v139 = vshrl.u32 %v138, 7
    %v140 = vsub.s32 0, %v139
    %v141 = vrot.slane %v136, %v140
    %vm143 = vcmask 80896
    %v145 = vsel %vm143, %v126, 0
    %v148 = vsel %vm143, %v127, 0
    %v151 = vsel %vm143, %v128, 0
    %v154 = vsel %vm143, %v129, 0
    %v157 = vsel %vm143, %v130, 0
    %v160 = vsel %vm143, %v131, 0
    %v163 = vsel %vm143, %v132, 0
    %v166 = vsel %vm143, %v133, 0
    %vm168 = vcmask 1041408
    %v170 = vsel %vm168, %v135, 0
    %172 = vmatprep.subr.mxu0 0.0
    %173 = vmatpush1.msra.mxu0 %v134
    %174 = vmatprep.subr.mxu0 0.0
    %175 = vmatpush1.msra.mxu0 %v170
    %176 = vmatprep.subr.mxu0 0.0
    %177 = vmatpush1.msra.mxu0 0.0
    %178 = vmatprep.subr.mxu0 0.0
    %179 = vmatpush1.msra.mxu0 0.0
    %180 = vmatprep.subr.mxu0 0.0
    %181 = vmatpush1.msra.mxu0 0.0
    %182 = vmatprep.subr.mxu0 0.0
    %183 = vmatpush1.msra.mxu0 0.0
    %184 = vmatprep.subr.mxu0 0.0
    %185 = vmatpush1.msra.mxu0 0.0
    %186 = vmatprep.subr.mxu0 0.0
    %187 = vmatpush1.msra.mxu0 0.0
    %188 = vmatprep.subr.mxu0 0.0
    %189 = vmatpush1.msra.mxu0 0.0
    %190 = vmatprep.subr.mxu0 0.0
    %191 = vmatpush1.msra.mxu0 0.0
    %192 = vmatprep.subr.mxu0 0.0
    %193 = vmatpush1.msra.mxu0 0.0
    %194 = vmatprep.subr.mxu0 0.0
    %195 = vmatpush1.msra.mxu0 0.0
    %196 = vmatprep.subr.mxu0 0.0
    %197 = vmatpush1.msra.mxu0 0.0
    %198 = vmatprep.subr.mxu0 0.0
    %199 = vmatpush1.msra.mxu0 0.0
    %200 = vmatprep.subr.mxu0 0.0
    %201 = vmatpush1.msra.mxu0 0.0
    %202 = vmatprep.subr.mxu0 0.0
    %203 = vmatpush1.msra.mxu0 0.0
    %204 = vmatprep.subr.mxu0 0.0
    %205 = vmatpush1.msra.mxu0 0.0
    %206 = vmatprep.subr.mxu0 0.0
    %207 = vmatpush1.msra.mxu0 0.0
    %208 = vmatprep.subr.mxu0 0.0
    %209 = vmatpush1.msra.mxu0 0.0
    %210 = vmatprep.subr.mxu0 0.0
    %211 = vmatpush1.msra.mxu0 0.0
    %212 = vmatprep.subr.mxu0 0.0
    %213 = vmatpush1.msra.mxu0 0.0
    %214 = vmatprep.subr.mxu0 0.0
    %215 = vmatpush1.msra.mxu0 0.0
    %216 = vmatprep.subr.mxu0 0.0
    %217 = vmatpush1.msra.mxu0 0.0
    %218 = vmatprep.subr.mxu0 0.0
    %219 = vmatpush1.msra.mxu0 0.0
    %220 = vmatprep.subr.mxu0 0.0
    %221 = vmatpush1.msra.mxu0 0.0
    %222 = vmatprep.subr.mxu0 0.0
    %223 = vmatpush1.msra.mxu0 0.0
    %224 = vmatprep.subr.mxu0 0.0
    %225 = vmatpush1.msra.mxu0 0.0
    %226 = vmatprep.subr.mxu0 0.0
    %227 = vmatpush1.msra.mxu0 0.0
    %228 = vmatprep.subr.mxu0 0.0
    %229 = vmatpush1.msra.mxu0 0.0
    %230 = vmatprep.subr.mxu0 0.0
    %231 = vmatpush1.msra.mxu0 0.0
    %232 = vmatprep.subr.mxu0 0.0
    %233 = vmatpush1.msra.mxu0 0.0
    %234 = vmatprep.subr.mxu0 0.0
    %235 = vmatpush1.msra.mxu0 0.0
    %236 = vmatprep.mubr.f32.mxu0 0.0
    %237 = vmatmul.mubr.f32.gmra.mrb[0].mxu0 %v145
    %v238 = vpop.f32.mrb[0].mxu0
    %v239 = vadd.f32 %v141, %v238
    %v240 = vpop.f32.mrb[0].mxu0
    %241 = vmatprep.mubr.f32.mxu0 0.0
    %242 = vmatmul.mubr.f32.gmra.mrb[0].mxu0 %v148
    %v243 = vpop.f32.mrb[0].mxu0
    %v244 = vadd.f32 %v141, %v243
    %v245 = vpop.f32.mrb[0].mxu0
    %246 = vmatprep.mubr.f32.mxu0 0.0
    %247 = vmatmul.mubr.f32.gmra.mrb[0].mxu0 %v151
    %v248 = vpop.f32.mrb[0].mxu0
    %v249 = vadd.f32 %v141, %v248
    %v250 = vpop.f32.mrb[0].mxu0
    %251 = vmatprep.mubr.f32.mxu0 0.0
    %252 = vmatmul.mubr.f32.gmra.mrb[0].mxu0 %v154
    %v253 = vpop.f32.mrb[0].mxu0
    %v254 = vadd.f32 %v141, %v253
    %v255 = vpop.f32.mrb[0].mxu0
    %256 = vmatprep.mubr.f32.mxu0 0.0
    %257 = vmatmul.mubr.f32.gmra.mrb[0].mxu0 %v157
    %v258 = vpop.f32.mrb[0].mxu0
    %v259 = vadd.f32 %v141, %v258
    %v260 = vpop.f32.mrb[0].mxu0
    %261 = vmatprep.mubr.f32.mxu0 0.0
    %262 = vmatmul.mubr.f32.gmra.mrb[0].mxu0 %v160
    %v263 = vpop.f32.mrb[0].mxu0
    %v264 = vadd.f32 %v141, %v263
    %v265 = vpop.f32.mrb[0].mxu0
    %266 = vmatprep.mubr.f32.mxu0 0.0
    %267 = vmatmul.mubr.f32.gmra.mrb[0].mxu0 %v163
    %v268 = vpop.f32.mrb[0].mxu0
    %v269 = vadd.f32 %v141, %v268
    %v270 = vpop.f32.mrb[0].mxu0
    %271 = vmatprep.mubr.f32.mxu0 0.0
    %272 = vmatmul.mubr.f32.gmra.mrb[0].mxu0 %v166
    %v273 = vpop.f32.mrb[0].mxu0
    %v274 = vadd.f32 %v141, %v273
    %v275 = vpop.f32.mrb[0].mxu0
    %276 = vdwg.mxu0
    %v277 = vmax.f32 %v239, 0.0
    %v278 = vmax.f32 %v244, 0.0
    %v279 = vmax.f32 %v249, 0.0
    %v280 = vmax.f32 %v254, 0.0
    %v281 = vmax.f32 %v259, 0.0
    %v282 = vmax.f32 %v264, 0.0
    %v283 = vmax.f32 %v269, 0.0
    %v284 = vmax.f32 %v274, 0.0
    %v285 = vld [vmem:[#allocation9] sm:$0xff]
    %v286 = vld [vmem:[#allocation9 + $0x8] sm:$0xff]
    %v287 = vld [vmem:[#allocation9 + $0x10] sm:$0xff]
    %v288 = vld [vmem:[#allocation9 + $0x18] sm:$0xff]
    %v289 = vld [vmem:[%s5] sm:$0x1]
    %v291 = vlaneseq
    %v292 = vshrl.u32 %v291, 7
    %v293 = vsub.s32 0, %v292
    %v294 = vrot.slane %v289, %v293
    %vm296 = vcmask 261120
    %v298 = vsel %vm296, %v277, 0
    %v301 = vsel %vm296, %v278, 0
    %v304 = vsel %vm296, %v279, 0
    %v307 = vsel %vm296, %v280, 0
    %v310 = vsel %vm296, %v281, 0
    %v313 = vsel %vm296, %v282, 0
    %v316 = vsel %vm296, %v283, 0
    %v319 = vsel %vm296, %v284, 0
    %321 = vmatprep.subr.mxu0 0.0
    %322 = vmatpush1.msra.mxu0 %v285
    %323 = vmatprep.subr.mxu0 0.0
    %324 = vmatpush1.msra.mxu0 %v286
    %325 = vmatprep.subr.mxu0 0.0
    %326 = vmatpush1.msra.mxu0 %v287
    %327 = vmatprep.subr.mxu0 0.0
    %328 = vmatpush1.msra.mxu0 %v288
    %329 = vmatprep.subr.mxu0 0.0
    %330 = vmatpush1.msra.mxu0 0.0
    %331 = vmatprep.subr.mxu0 0.0
    %332 = vmatpush1.msra.mxu0 0.0
    %333 = vmatprep.subr.mxu0 0.0
    %334 = vmatpush1.msra.mxu0 0.0
    %335 = vmatprep.subr.mxu0 0.0
    %336 = vmatpush1.msra.mxu0 0.0
    %337 = vmatprep.subr.mxu0 0.0
    %338 = vmatpush1.msra.mxu0 0.0
    %339 = vmatprep.subr.mxu0 0.0
    %340 = vmatpush1.msra.mxu0 0.0
    %341 = vmatprep.subr.mxu0 0.0
    %342 = vmatpush1.msra.mxu0 0.0
    %343 = vmatprep.subr.mxu0 0.0
    %344 = vmatpush1.msra.mxu0 0.0
    %345 = vmatprep.subr.mxu0 0.0
    %346 = vmatpush1.msra.mxu0 0.0
    %347 = vmatprep.subr.mxu0 0.0
    %348 = vmatpush1.msra.mxu0 0.0
    %349 = vmatprep.subr.mxu0 0.0
    %350 = vmatpush1.msra.mxu0 0.0
    %351 = vmatprep.subr.mxu0 0.0
    %352 = vmatpush1.msra.mxu0 0.0
    %353 = vmatprep.subr.mxu0 0.0
    %354 = vmatpush1.msra.mxu0 0.0
    %355 = vmatprep.subr.mxu0 0.0
    %356 = vmatpush1.msra.mxu0 0.0
    %357 = vmatprep.subr.mxu0 0.0
    %358 = vmatpush1.msra.mxu0 0.0
    %359 = vmatprep.subr.mxu0 0.0
    %360 = vmatpush1.msra.mxu0 0.0
    %361 = vmatprep.subr.mxu0 0.0
    %362 = vmatpush1.msra.mxu0 0.0
    %363 = vmatprep.subr.mxu0 0.0
    %364 = vmatpush1.msra.mxu0 0.0
    %365 = vmatprep.subr.mxu0 0.0
    %366 = vmatpush1.msra.mxu0 0.0
    %367 = vmatprep.subr.mxu0 0.0
    %368 = vmatpush1.msra.mxu0 0.0
    %369 = vmatprep.subr.mxu0 0.0
    %370 = vmatpush1.msra.mxu0 0.0
    %371 = vmatprep.subr.mxu0 0.0
    %372 = vmatpush1.msra.mxu0 0.0
    %373 = vmatprep.subr.mxu0 0.0
    %374 = vmatpush1.msra.mxu0 0.0
    %375 = vmatprep.subr.mxu0 0.0
    %376 = vmatpush1.msra.mxu0 0.0
    %377 = vmatprep.subr.mxu0 0.0
    %378 = vmatpush1.msra.mxu0 0.0
    %379 = vmatprep.subr.mxu0 0.0
    %380 = vmatpush1.msra.mxu0 0.0
    %381 = vmatprep.subr.mxu0 0.0
    %382 = vmatpush1.msra.mxu0 0.0
    %383 = vmatprep.subr.mxu0 0.0
    %384 = vmatpush1.msra.mxu0 0.0
    %385 = vmatprep.mubr.f32.mxu0 0.0
    %386 = vmatmul.mubr.f32.gmra.mrb[0].mxu0 %v298
    %v387 = vpop.f32.mrb[0].mxu0
    %v388 = vadd.f32 %v294, %v387
    %v389 = vpop.f32.mrb[0].mxu0
    %390 = vmatprep.mubr.f32.mxu0 0.0
    %391 = vmatmul.mubr.f32.gmra.mrb[0].mxu0 %v301
    %v392 = vpop.f32.mrb[0].mxu0
    %v393 = vadd.f32 %v294, %v392
    %v394 = vpop.f32.mrb[0].mxu0
    %395 = vmatprep.mubr.f32.mxu0 0.0
    %396 = vmatmul.mubr.f32.gmra.mrb[0].mxu0 %v304
    %v397 = vpop.f32.mrb[0].mxu0
    %v398 = vadd.f32 %v294, %v397
    %v399 = vpop.f32.mrb[0].mxu0
    %400 = vmatprep.mubr.f32.mxu0 0.0
    %401 = vmatmul.mubr.f32.gmra.mrb[0].mxu0 %v307
    %v402 = vpop.f32.mrb[0].mxu0
    %v403 = vadd.f32 %v294, %v402
    %v404 = vpop.f32.mrb[0].mxu0
    %405 = vmatprep.mubr.f32.mxu0 0.0
    %406 = vmatmul.mubr.f32.gmra.mrb[0].mxu0 %v310
    %v407 = vpop.f32.mrb[0].mxu0
    %v408 = vadd.f32 %v294, %v407
    %v409 = vpop.f32.mrb[0].mxu0
    %410 = vmatprep.mubr.f32.mxu0 0.0
    %411 = vmatmul.mubr.f32.gmra.mrb[0].mxu0 %v313
    %v412 = vpop.f32.mrb[0].mxu0
    %v413 = vadd.f32 %v294, %v412
    %v414 = vpop.f32.mrb[0].mxu0
    %415 = vmatprep.mubr.f32.mxu0 0.0
    %416 = vmatmul.mubr.f32.gmra.mrb[0].mxu0 %v316
    %v417 = vpop.f32.mrb[0].mxu0
    %v418 = vadd.f32 %v294, %v417
    %v419 = vpop.f32.mrb[0].mxu0
    %420 = vmatprep.mubr.f32.mxu0 0.0
    %421 = vmatmul.mubr.f32.gmra.mrb[0].mxu0 %v319
    %v422 = vpop.f32.mrb[0].mxu0
    %v423 = vadd.f32 %v294, %v422
    %v424 = vpop.f32.mrb[0].mxu0
    %425 = vdwg.mxu0
    %vm426 = vcmask 785408
    %427 = vst.msk [vmem:[#allocation2] sm:$0xff] %vm426, %v388
    %428 = vst.msk [vmem:[#allocation2 + $0x8] sm:$0xff] %vm426, %v393
    %429 = vst.msk [vmem:[#allocation2 + $0x10] sm:$0xff] %vm426, %v398
    %430 = vst.msk [vmem:[#allocation2 + $0x18] sm:$0xff] %vm426, %v403
    %431 = vst.msk [vmem:[#allocation2 + $0x20] sm:$0xff] %vm426, %v408
    %432 = vst.msk [vmem:[#allocation2 + $0x28] sm:$0xff] %vm426, %v413
    %433 = vst.msk [vmem:[#allocation2 + $0x30] sm:$0xff] %vm426, %v418
    %434 = vst.msk [vmem:[#allocation2 + $0x38] sm:$0xff] %vm426, %v423
    %v435 = vld [vmem:[#allocation11] sm:$0xff]
    %v436 = vld [vmem:[#allocation11 + $0x8] sm:$0xff]
    %v437 = vld [vmem:[#allocation11 + $0x10] sm:$0xff]
    %v438 = vld [vmem:[#allocation11 + $0x18] sm:$0xff]
    %v439 = vld [vmem:[%s7] sm:$0x1]
    %v440 = vld [vmem:[#allocation6] sm:$0xff]
    %v442 = vsel %vm296, %v440, 0
    %444 = vmatprep.subr.mxu0 0.0
    %445 = vmatpush1.msra.mxu0 %v435
    %446 = vmatprep.subr.mxu0 0.0
    %447 = vmatpush1.msra.mxu0 %v436
    %448 = vmatprep.subr.mxu0 0.0
    %449 = vmatpush1.msra.mxu0 %v437
    %450 = vmatprep.subr.mxu0 0.0
    %451 = vmatpush1.msra.mxu0 %v438
    %452 = vmatprep.subr.mxu0 0.0
    %453 = vmatpush1.msra.mxu0 0.0
    %454 = vmatprep.subr.mxu0 0.0
    %455 = vmatpush1.msra.mxu0 0.0
    %456 = vmatprep.subr.mxu0 0.0
    %457 = vmatpush1.msra.mxu0 0.0
    %458 = vmatprep.subr.mxu0 0.0
    %459 = vmatpush1.msra.mxu0 0.0
    %460 = vmatprep.subr.mxu0 0.0
    %461 = vmatpush1.msra.mxu0 0.0
    %462 = vmatprep.subr.mxu0 0.0
    %463 = vmatpush1.msra.mxu0 0.0
    %464 = vmatprep.subr.mxu0 0.0
    %465 = vmatpush1.msra.mxu0 0.0
    %466 = vmatprep.subr.mxu0 0.0
    %467 = vmatpush1.msra.mxu0 0.0
    %468 = vmatprep.subr.mxu0 0.0
    %469 = vmatpush1.msra.mxu0 0.0
    %470 = vmatprep.subr.mxu0 0.0
    %471 = vmatpush1.msra.mxu0 0.0
    %472 = vmatprep.subr.mxu0 0.0
    %473 = vmatpush1.msra.mxu0 0.0
    %474 = vmatprep.subr.mxu0 0.0
    %475 = vmatpush1.msra.mxu0 0.0
    %476 = vmatprep.subr.mxu0 0.0
    %477 = vmatpush1.msra.mxu0 0.0
    %478 = vmatprep.subr.mxu0 0.0
    %479 = vmatpush1.msra.mxu0 0.0
    %480 = vmatprep.subr.mxu0 0.0
    %481 = vmatpush1.msra.mxu0 0.0
    %482 = vmatprep.subr.mxu0 0.0
    %483 = vmatpush1.msra.mxu0 0.0
    %484 = vmatprep.subr.mxu0 0.0
    %485 = vmatpush1.msra.mxu0 0.0
    %486 = vmatprep.subr.mxu0 0.0
    %487 = vmatpush1.msra.mxu0 0.0
    %488 = vmatprep.subr.mxu0 0.0
    %489 = vmatpush1.msra.mxu0 0.0
    %490 = vmatprep.subr.mxu0 0.0
    %491 = vmatpush1.msra.mxu0 0.0
    %492 = vmatprep.subr.mxu0 0.0
    %493 = vmatpush1.msra.mxu0 0.0
    %494 = vmatprep.subr.mxu0 0.0
    %495 = vmatpush1.msra.mxu0 0.0
    %496 = vmatprep.subr.mxu0 0.0
    %497 = vmatpush1.msra.mxu0 0.0
    %498 = vmatprep.subr.mxu0 0.0
    %499 = vmatpush1.msra.mxu0 0.0
    %500 = vmatprep.subr.mxu0 0.0
    %501 = vmatpush1.msra.mxu0 0.0
    %502 = vmatprep.subr.mxu0 0.0
    %503 = vmatpush1.msra.mxu0 0.0
    %504 = vmatprep.subr.mxu0 0.0
    %505 = vmatpush1.msra.mxu0 0.0
    %506 = vmatprep.subr.mxu0 0.0
    %507 = vmatpush1.msra.mxu0 0.0
    %508 = vmatprep.mubr.f32.mxu0 0.0
    %509 = vmatmul.mubr.f32.gmra.mrb[0].mxu0 %v442
    %v510 = vpop.f32.mrb[0].mxu0
    %v511 = vadd.f32 0.0, %v510
    %v512 = vpop.f32.mrb[0].mxu0
    %513 = vdwg.mxu0
    %v514 = vld [vmem:[#allocation2] sm:$0xff]
    %v515 = vadd.f32 %v514, %v511
    %v516 = vxor.u32 %v515, 2147483648
    %v517 = vmul.f32 %v516, 1.442695
    %v518 = vpow.pop %v517
    %v519 = vadd.f32 %v518, 1.0
    %v520 = vrcp.pop %v519
    %v521 = vmul.f32 1.0, %v520
    %v523 = vlaneseq
    %v524 = vshrl.u32 %v523, 7
    %v525 = vsub.s32 0, %v524
    %v526 = vrot.slane %v439, %v525
    %527 = vrot.lane.b32.xlu0 %v526, 64
    %v528 = vpop.permute.xlu0 %527
    %v530 = vadd.f32 %v511, %v528
    %532 = vrot.lane.b32.xlu0 %v530, 64
    %v533 = vpop.permute.xlu0 %532
    %v535 = vmul.f32 %v521, %v533
    %537 = vrot.lane.b32.xlu0 %v535, 64
    %v538 = vpop.permute.xlu0 %537
    %v540 = vadd.f32 %v514, %v538
    %v541 = vtanh.pop %v540
    %v542 = vsub.f32 1.0, %v521
    %544 = vrot.lane.b32.xlu0 %v541, 96
    %v545 = vpop.permute.xlu0 %544
    %v547 = vmul.f32 %v542, %v545
    %548 = vrot.lane.b32.xlu0 %v440, 32
    %v549 = vpop.permute.xlu0 %548
    %v551 = vmul.f32 %v521, %v549
    %v552 = vadd.f32 %v547, %v551
    %554 = vrot.lane.b32.xlu0 %v552, 96
    %v555 = vpop.permute.xlu0 %554
    %557 = vst.msk [vmem:[#allocation14] sm:$0xff] %vm296, %v555
    %v558 = vsel %vm296, %v555, 0
    %560 = vmatprep.subr.mxu0 0.0
    %561 = vmatpush1.msra.mxu0 %v435
    %562 = vmatprep.subr.mxu0 0.0
    %563 = vmatpush1.msra.mxu0 %v436
    %564 = vmatprep.subr.mxu0 0.0
    %565 = vmatpush1.msra.mxu0 %v437
    %566 = vmatprep.subr.mxu0 0.0
    %567 = vmatpush1.msra.mxu0 %v438
    %568 = vmatprep.subr.mxu0 0.0
    %569 = vmatpush1.msra.mxu0 0.0
    %570 = vmatprep.subr.mxu0 0.0
    %571 = vmatpush1.msra.mxu0 0.0
    %572 = vmatprep.subr.mxu0 0.0
    %573 = vmatpush1.msra.mxu0 0.0
    %574 = vmatprep.subr.mxu0 0.0
    %575 = vmatpush1.msra.mxu0 0.0
    %576 = vmatprep.subr.mxu0 0.0
    %577 = vmatpush1.msra.mxu0 0.0
    %578 = vmatprep.subr.mxu0 0.0
    %579 = vmatpush1.msra.mxu0 0.0
    %580 = vmatprep.subr.mxu0 0.0
    %581 = vmatpush1.msra.mxu0 0.0
    %582 = vmatprep.subr.mxu0 0.0
    %583 = vmatpush1.msra.mxu0 0.0
    %584 = vmatprep.subr.mxu0 0.0
    %585 = vmatpush1.msra.mxu0 0.0
    %586 = vmatprep.subr.mxu0 0.0
    %587 = vmatpush1.msra.mxu0 0.0
    %588 = vmatprep.subr.mxu0 0.0
    %589 = vmatpush1.msra.mxu0 0.0
    %590 = vmatprep.subr.mxu0 0.0
    %591 = vmatpush1.msra.mxu0 0.0
    %592 = vmatprep.subr.mxu0 0.0
    %593 = vmatpush1.msra.mxu0 0.0
    %594 = vmatprep.subr.mxu0 0.0
    %595 = vmatpush1.msra.mxu0 0.0
    %596 = vmatprep.subr.mxu0 0.0
    %597 = vmatpush1.msra.mxu0 0.0
    %598 = vmatprep.subr.mxu0 0.0
    %599 = vmatpush1.msra.mxu0 0.0
    %600 = vmatprep.subr.mxu0 0.0
    %601 = vmatpush1.msra.mxu0 0.0
    %602 = vmatprep.subr.mxu0 0.0
    %603 = vmatpush1.msra.mxu0 0.0
    %604 = vmatprep.subr.mxu0 0.0
    %605 = vmatpush1.msra.mxu0 0.0
    %606 = vmatprep.subr.mxu0 0.0
    %607 = vmatpush1.msra.mxu0 0.0
    %608 = vmatprep.subr.mxu0 0.0
    %609 = vmatpush1.msra.mxu0 0.0
    %610 = vmatprep.subr.mxu0 0.0
    %611 = vmatpush1.msra.mxu0 0.0
    %612 = vmatprep.subr.mxu0 0.0
    %613 = vmatpush1.msra.mxu0 0.0
    %614 = vmatprep.subr.mxu0 0.0
    %615 = vmatpush1.msra.mxu0 0.0
    %616 = vmatprep.subr.mxu0 0.0
    %617 = vmatpush1.msra.mxu0 0.0
    %618 = vmatprep.subr.mxu0 0.0
    %619 = vmatpush1.msra.mxu0 0.0
    %620 = vmatprep.subr.mxu0 0.0
    %621 = vmatpush1.msra.mxu0 0.0
    %622 = vmatprep.subr.mxu0 0.0
    %623 = vmatpush1.msra.mxu0 0.0
    %624 = vmatprep.mubr.f32.mxu0 0.0
    %625 = vmatmul.mubr.f32.gmra.mrb[0].mxu0 %v558
    %v626 = vpop.f32.mrb[0].mxu0
    %v627 = vadd.f32 0.0, %v626
    %v628 = vpop.f32.mrb[0].mxu0
    %629 = vdwg.mxu0
    %s630 = scalar_lea.vmem [#allocation2], 8
    %v631 = vld [vmem:[%s630] sm:$0xff]
    %v632 = vadd.f32 %v631, %v627
    %v633 = vxor.u32 %v632, 2147483648
    %v634 = vmul.f32 %v633, 1.442695
    %v635 = vpow.pop %v634
    %v636 = vadd.f32 %v635, 1.0
    %v637 = vrcp.pop %v636
    %v638 = vmul.f32 1.0, %v637
    %v639 = vadd.f32 %v627, %v528
    %641 = vrot.lane.b32.xlu0 %v639, 64
    %v642 = vpop.permute.xlu0 %641
    %v644 = vmul.f32 %v638, %v642
    %646 = vrot.lane.b32.xlu0 %v644, 64
    %v647 = vpop.permute.xlu0 %646
    %v649 = vadd.f32 %v631, %v647
    %v650 = vtanh.pop %v649
    %v651 = vsub.f32 1.0, %v638
    %653 = vrot.lane.b32.xlu0 %v650, 96
    %v654 = vpop.permute.xlu0 %653
    %v656 = vmul.f32 %v651, %v654
    %v657 = vmul.f32 %v638, %v552
    %v658 = vadd.f32 %v656, %v657
    %660 = vrot.lane.b32.xlu0 %v658, 96
    %v661 = vpop.permute.xlu0 %660
    %s663 = scalar_lea.vmem [#allocation14], 8
    %664 = vst.msk [vmem:[%s663] sm:$0xff] %vm296, %v661
    %v665 = vsel %vm296, %v661, 0
    %667 = vmatprep.subr.mxu0 0.0
    %668 = vmatpush1.msra.mxu0 %v435
    %669 = vmatprep.subr.mxu0 0.0
    %670 = vmatpush1.msra.mxu0 %v436
    %671 = vmatprep.subr.mxu0 0.0
    %672 = vmatpush1.msra.mxu0 %v437
    %673 = vmatprep.subr.mxu0 0.0
    %674 = vmatpush1.msra.mxu0 %v438
    %675 = vmatprep.subr.mxu0 0.0
    %676 = vmatpush1.msra.mxu0 0.0
    %677 = vmatprep.subr.mxu0 0.0
    %678 = vmatpush1.msra.mxu0 0.0
    %679 = vmatprep.subr.mxu0 0.0
    %680 = vmatpush1.msra.mxu0 0.0
    %681 = vmatprep.subr.mxu0 0.0
    %682 = vmatpush1.msra.mxu0 0.0
    %683 = vmatprep.subr.mxu0 0.0
    %684 = vmatpush1.msra.mxu0 0.0
    %685 = vmatprep.subr.mxu0 0.0
    %686 = vmatpush1.msra.mxu0 0.0
    %687 = vmatprep.subr.mxu0 0.0
    %688 = vmatpush1.msra.mxu0 0.0
    %689 = vmatprep.subr.mxu0 0.0
    %690 = vmatpush1.msra.mxu0 0.0
    %691 = vmatprep.subr.mxu0 0.0
    %692 = vmatpush1.msra.mxu0 0.0
    %693 = vmatprep.subr.mxu0 0.0
    %694 = vmatpush1.msra.mxu0 0.0
    %695 = vmatprep.subr.mxu0 0.0
    %696 = vmatpush1.msra.mxu0 0.0
    %697 = vmatprep.subr.mxu0 0.0
    %698 = vmatpush1.msra.mxu0 0.0
    %699 = vmatprep.subr.mxu0 0.0
    %700 = vmatpush1.msra.mxu0 0.0
    %701 = vmatprep.subr.mxu0 0.0
    %702 = vmatpush1.msra.mxu0 0.0
    %703 = vmatprep.subr.mxu0 0.0
    %704 = vmatpush1.msra.mxu0 0.0
    %705 = vmatprep.subr.mxu0 0.0
    %706 = vmatpush1.msra.mxu0 0.0
    %707 = vmatprep.subr.mxu0 0.0
    %708 = vmatpush1.msra.mxu0 0.0
    %709 = vmatprep.subr.mxu0 0.0
    %710 = vmatpush1.msra.mxu0 0.0
    %711 = vmatprep.subr.mxu0 0.0
    %712 = vmatpush1.msra.mxu0 0.0
    %713 = vmatprep.subr.mxu0 0.0
    %714 = vmatpush1.msra.mxu0 0.0
    %715 = vmatprep.subr.mxu0 0.0
    %716 = vmatpush1.msra.mxu0 0.0
    %717 = vmatprep.subr.mxu0 0.0
    %718 = vmatpush1.msra.mxu0 0.0
    %719 = vmatprep.subr.mxu0 0.0
    %720 = vmatpush1.msra.mxu0 0.0
    %721 = vmatprep.subr.mxu0 0.0
    %722 = vmatpush1.msra.mxu0 0.0
    %723 = vmatprep.subr.mxu0 0.0
    %724 = vmatpush1.msra.mxu0 0.0
    %725 = vmatprep.subr.mxu0 0.0
    %726 = vmatpush1.msra.mxu0 0.0
    %727 = vmatprep.subr.mxu0 0.0
    %728 = vmatpush1.msra.mxu0 0.0
    %729 = vmatprep.subr.mxu0 0.0
    %730 = vmatpush1.msra.mxu0 0.0
    %731 = vmatprep.mubr.f32.mxu0 0.0
    %732 = vmatmul.mubr.f32.gmra.mrb[0].mxu0 %v665
    %v733 = vpop.f32.mrb[0].mxu0
    %v734 = vadd.f32 0.0, %v733
    %v735 = vpop.f32.mrb[0].mxu0
    %736 = vdwg.mxu0
    %s737 = scalar_lea.vmem [#allocation2], 16
    %v738 = vld [vmem:[%s737] sm:$0xff]
    %v739 = vadd.f32 %v738, %v734
    %v740 = vxor.u32 %v739, 2147483648
    %v741 = vmul.f32 %v740, 1.442695
    %v742 = vpow.pop %v741
    %v743 = vadd.f32 %v742, 1.0
    %v744 = vrcp.pop %v743
    %v745 = vmul.f32 1.0, %v744
    %v746 = vadd.f32 %v734, %v528
    %748 = vrot.lane.b32.xlu0 %v746, 64
    %v749 = vpop.permute.xlu0 %748
    %v751 = vmul.f32 %v745, %v749
    %753 = vrot.lane.b32.xlu0 %v751, 64
    %v754 = vpop.permute.xlu0 %753
    %v756 = vadd.f32 %v738, %v754
    %v757 = vtanh.pop %v756
    %v758 = vsub.f32 1.0, %v745
    %760 = vrot.lane.b32.xlu0 %v757, 96
    %v761 = vpop.permute.xlu0 %760
    %v763 = vmul.f32 %v758, %v761
    %v764 = vmul.f32 %v745, %v658
    %v765 = vadd.f32 %v763, %v764
    %767 = vrot.lane.b32.xlu0 %v765, 96
    %v768 = vpop.permute.xlu0 %767
    %s770 = scalar_lea.vmem [#allocation14], 16
    %771 = vst.msk [vmem:[%s770] sm:$0xff] %vm296, %v768
    %v772 = vsel %vm296, %v768, 0
    %774 = vmatprep.subr.mxu0 0.0
    %775 = vmatpush1.msra.mxu0 %v435
    %776 = vmatprep.subr.mxu0 0.0
    %777 = vmatpush1.msra.mxu0 %v436
    %778 = vmatprep.subr.mxu0 0.0
    %779 = vmatpush1.msra.mxu0 %v437
    %780 = vmatprep.subr.mxu0 0.0
    %781 = vmatpush1.msra.mxu0 %v438
    %782 = vmatprep.subr.mxu0 0.0
    %783 = vmatpush1.msra.mxu0 0.0
    %784 = vmatprep.subr.mxu0 0.0
    %785 = vmatpush1.msra.mxu0 0.0
    %786 = vmatprep.subr.mxu0 0.0
    %787 = vmatpush1.msra.mxu0 0.0
    %788 = vmatprep.subr.mxu0 0.0
    %789 = vmatpush1.msra.mxu0 0.0
    %790 = vmatprep.subr.mxu0 0.0
    %791 = vmatpush1.msra.mxu0 0.0
    %792 = vmatprep.subr.mxu0 0.0
    %793 = vmatpush1.msra.mxu0 0.0
    %794 = vmatprep.subr.mxu0 0.0
    %795 = vmatpush1.msra.mxu0 0.0
    %796 = vmatprep.subr.mxu0 0.0
    %797 = vmatpush1.msra.mxu0 0.0
    %798 = vmatprep.subr.mxu0 0.0
    %799 = vmatpush1.msra.mxu0 0.0
    %800 = vmatprep.subr.mxu0 0.0
    %801 = vmatpush1.msra.mxu0 0.0
    %802 = vmatprep.subr.mxu0 0.0
    %803 = vmatpush1.msra.mxu0 0.0
    %804 = vmatprep.subr.mxu0 0.0
    %805 = vmatpush1.msra.mxu0 0.0
    %806 = vmatprep.subr.mxu0 0.0
    %807 = vmatpush1.msra.mxu0 0.0
    %808 = vmatprep.subr.mxu0 0.0
    %809 = vmatpush1.msra.mxu0 0.0
    %810 = vmatprep.subr.mxu0 0.0
    %811 = vmatpush1.msra.mxu0 0.0
    %812 = vmatprep.subr.mxu0 0.0
    %813 = vmatpush1.msra.mxu0 0.0
    %814 = vmatprep.subr.mxu0 0.0
    %815 = vmatpush1.msra.mxu0 0.0
    %816 = vmatprep.subr.mxu0 0.0
    %817 = vmatpush1.msra.mxu0 0.0
    %818 = vmatprep.subr.mxu0 0.0
    %819 = vmatpush1.msra.mxu0 0.0
    %820 = vmatprep.subr.mxu0 0.0
    %821 = vmatpush1.msra.mxu0 0.0
    %822 = vmatprep.subr.mxu0 0.0
    %823 = vmatpush1.msra.mxu0 0.0
    %824 = vmatprep.subr.mxu0 0.0
    %825 = vmatpush1.msra.mxu0 0.0
    %826 = vmatprep.subr.mxu0 0.0
    %827 = vmatpush1.msra.mxu0 0.0
    %828 = vmatprep.subr.mxu0 0.0
    %829 = vmatpush1.msra.mxu0 0.0
    %830 = vmatprep.subr.mxu0 0.0
    %831 = vmatpush1.msra.mxu0 0.0
    %832 = vmatprep.subr.mxu0 0.0
    %833 = vmatpush1.msra.mxu0 0.0
    %834 = vmatprep.subr.mxu0 0.0
    %835 = vmatpush1.msra.mxu0 0.0
    %836 = vmatprep.subr.mxu0 0.0
    %837 = vmatpush1.msra.mxu0 0.0
    %838 = vmatprep.mubr.f32.mxu0 0.0
    %839 = vmatmul.mubr.f32.gmra.mrb[0].mxu0 %v772
    %v840 = vpop.f32.mrb[0].mxu0
    %v841 = vadd.f32 0.0, %v840
    %v842 = vpop.f32.mrb[0].mxu0
    %843 = vdwg.mxu0
    %s844 = scalar_lea.vmem [#allocation2], 24
    %v845 = vld [vmem:[%s844] sm:$0xff]
    %v846 = vadd.f32 %v845, %v841
    %v847 = vxor.u32 %v846, 2147483648
    %v848 = vmul.f32 %v847, 1.442695
    %v849 = vpow.pop %v848
    %v850 = vadd.f32 %v849, 1.0
    %v851 = vrcp.pop %v850
    %v852 = vmul.f32 1.0, %v851
    %v853 = vadd.f32 %v841, %v528
    %855 = vrot.lane.b32.xlu0 %v853, 64
    %v856 = vpop.permute.xlu0 %855
    %v858 = vmul.f32 %v852, %v856
    %860 = vrot.lane.b32.xlu0 %v858, 64
    %v861 = vpop.permute.xlu0 %860
    %v863 = vadd.f32 %v845, %v861
    %v864 = vtanh.pop %v863
    %v865 = vsub.f32 1.0, %v852
    %867 = vrot.lane.b32.xlu0 %v864, 96
    %v868 = vpop.permute.xlu0 %867
    %v870 = vmul.f32 %v865, %v868
    %v871 = vmul.f32 %v852, %v765
    %v872 = vadd.f32 %v870, %v871
    %874 = vrot.lane.b32.xlu0 %v872, 96
    %v875 = vpop.permute.xlu0 %874
    %s877 = scalar_lea.vmem [#allocation14], 24
    %878 = vst.msk [vmem:[%s877] sm:$0xff] %vm296, %v875
    %v879 = vsel %vm296, %v875, 0
    %881 = vmatprep.subr.mxu0 0.0
    %882 = vmatpush1.msra.mxu0 %v435
    %883 = vmatprep.subr.mxu0 0.0
    %884 = vmatpush1.msra.mxu0 %v436
    %885 = vmatprep.subr.mxu0 0.0
    %886 = vmatpush1.msra.mxu0 %v437
    %887 = vmatprep.subr.mxu0 0.0
    %888 = vmatpush1.msra.mxu0 %v438
    %889 = vmatprep.subr.mxu0 0.0
    %890 = vmatpush1.msra.mxu0 0.0
    %891 = vmatprep.subr.mxu0 0.0
    %892 = vmatpush1.msra.mxu0 0.0
    %893 = vmatprep.subr.mxu0 0.0
    %894 = vmatpush1.msra.mxu0 0.0
    %895 = vmatprep.subr.mxu0 0.0
    %896 = vmatpush1.msra.mxu0 0.0
    %897 = vmatprep.subr.mxu0 0.0
    %898 = vmatpush1.msra.mxu0 0.0
    %899 = vmatprep.subr.mxu0 0.0
    %900 = vmatpush1.msra.mxu0 0.0
    %901 = vmatprep.subr.mxu0 0.0
    %902 = vmatpush1.msra.mxu0 0.0
    %903 = vmatprep.subr.mxu0 0.0
    %904 = vmatpush1.msra.mxu0 0.0
    %905 = vmatprep.subr.mxu0 0.0
    %906 = vmatpush1.msra.mxu0 0.0
    %907 = vmatprep.subr.mxu0 0.0
    %908 = vmatpush1.msra.mxu0 0.0
    %909 = vmatprep.subr.mxu0 0.0
    %910 = vmatpush1.msra.mxu0 0.0
    %911 = vmatprep.subr.mxu0 0.0
    %912 = vmatpush1.msra.mxu0 0.0
    %913 = vmatprep.subr.mxu0 0.0
    %914 = vmatpush1.msra.mxu0 0.0
    %915 = vmatprep.subr.mxu0 0.0
    %916 = vmatpush1.msra.mxu0 0.0
    %917 = vmatprep.subr.mxu0 0.0
    %918 = vmatpush1.msra.mxu0 0.0
    %919 = vmatprep.subr.mxu0 0.0
    %920 = vmatpush1.msra.mxu0 0.0
    %921 = vmatprep.subr.mxu0 0.0
    %922 = vmatpush1.msra.mxu0 0.0
    %923 = vmatprep.subr.mxu0 0.0
    %924 = vmatpush1.msra.mxu0 0.0
    %925 = vmatprep.subr.mxu0 0.0
    %926 = vmatpush1.msra.mxu0 0.0
    %927 = vmatprep.subr.mxu0 0.0
    %928 = vmatpush1.msra.mxu0 0.0
    %929 = vmatprep.subr.mxu0 0.0
    %930 = vmatpush1.msra.mxu0 0.0
    %931 = vmatprep.subr.mxu0 0.0
    %932 = vmatpush1.msra.mxu0 0.0
    %933 = vmatprep.subr.mxu0 0.0
    %934 = vmatpush1.msra.mxu0 0.0
    %935 = vmatprep.subr.mxu0 0.0
    %936 = vmatpush1.msra.mxu0 0.0
    %937 = vmatprep.subr.mxu0 0.0
    %938 = vmatpush1.msra.mxu0 0.0
    %939 = vmatprep.subr.mxu0 0.0
    %940 = vmatpush1.msra.mxu0 0.0
    %941 = vmatprep.subr.mxu0 0.0
    %942 = vmatpush1.msra.mxu0 0.0
    %943 = vmatprep.subr.mxu0 0.0
    %944 = vmatpush1.msra.mxu0 0.0
    %945 = vmatprep.mubr.f32.mxu0 0.0
    %946 = vmatmul.mubr.f32.gmra.mrb[0].mxu0 %v879
    %v947 = vpop.f32.mrb[0].mxu0
    %v948 = vadd.f32 0.0, %v947
    %v949 = vpop.f32.mrb[0].mxu0
    %950 = vdwg.mxu0
    %s951 = scalar_lea.vmem [#allocation2], 32
    %v952 = vld [vmem:[%s951] sm:$0xff]
    %v953 = vadd.f32 %v952, %v948
    %v954 = vxor.u32 %v953, 2147483648
    %v955 = vmul.f32 %v954, 1.442695
    %v956 = vpow.pop %v955
    %v957 = vadd.f32 %v956, 1.0
    %v958 = vrcp.pop %v957
    %v959 = vmul.f32 1.0, %v958
    %v960 = vadd.f32 %v948, %v528
    %962 = vrot.lane.b32.xlu0 %v960, 64
    %v963 = vpop.permute.xlu0 %962
    %v965 = vmul.f32 %v959, %v963
    %967 = vrot.lane.b32.xlu0 %v965, 64
    %v968 = vpop.permute.xlu0 %967
    %v970 = vadd.f32 %v952, %v968
    %v971 = vtanh.pop %v970
    %v972 = vsub.f32 1.0, %v959
    %974 = vrot.lane.b32.xlu0 %v971, 96
    %v975 = vpop.permute.xlu0 %974
    %v977 = vmul.f32 %v972, %v975
    %v978 = vmul.f32 %v959, %v872
    %v979 = vadd.f32 %v977, %v978
    %981 = vrot.lane.b32.xlu0 %v979, 96
    %v982 = vpop.permute.xlu0 %981
    %s984 = scalar_lea.vmem [#allocation14], 32
    %985 = vst.msk [vmem:[%s984] sm:$0xff] %vm296, %v982
    %v986 = vsel %vm296, %v982, 0
    %988 = vmatprep.subr.mxu0 0.0
    %989 = vmatpush1.msra.mxu0 %v435
    %990 = vmatprep.subr.mxu0 0.0
    %991 = vmatpush1.msra.mxu0 %v436
    %992 = vmatprep.subr.mxu0 0.0
    %993 = vmatpush1.msra.mxu0 %v437
    %994 = vmatprep.subr.mxu0 0.0
    %995 = vmatpush1.msra.mxu0 %v438
    %996 = vmatprep.subr.mxu0 0.0
    %997 = vmatpush1.msra.mxu0 0.0
    %998 = vmatprep.subr.mxu0 0.0
    %999 = vmatpush1.msra.mxu0 0.0
    %1000 = vmatprep.subr.mxu0 0.0
    %1001 = vmatpush1.msra.mxu0 0.0
    %1002 = vmatprep.subr.mxu0 0.0
    %1003 = vmatpush1.msra.mxu0 0.0
    %1004 = vmatprep.subr.mxu0 0.0
    %1005 = vmatpush1.msra.mxu0 0.0
    %1006 = vmatprep.subr.mxu0 0.0
    %1007 = vmatpush1.msra.mxu0 0.0
    %1008 = vmatprep.subr.mxu0 0.0
    %1009 = vmatpush1.msra.mxu0 0.0
    %1010 = vmatprep.subr.mxu0 0.0
    %1011 = vmatpush1.msra.mxu0 0.0
    %1012 = vmatprep.subr.mxu0 0.0
    %1013 = vmatpush1.msra.mxu0 0.0
    %1014 = vmatprep.subr.mxu0 0.0
    %1015 = vmatpush1.msra.mxu0 0.0
    %1016 = vmatprep.subr.mxu0 0.0
    %1017 = vmatpush1.msra.mxu0 0.0
    %1018 = vmatprep.subr.mxu0 0.0
    %1019 = vmatpush1.msra.mxu0 0.0
    %1020 = vmatprep.subr.mxu0 0.0
    %1021 = vmatpush1.msra.mxu0 0.0
    %1022 = vmatprep.subr.mxu0 0.0
    %1023 = vmatpush1.msra.mxu0 0.0
    %1024 = vmatprep.subr.mxu0 0.0
    %1025 = vmatpush1.msra.mxu0 0.0
    %1026 = vmatprep.subr.mxu0 0.0
    %1027 = vmatpush1.msra.mxu0 0.0
    %1028 = vmatprep.subr.mxu0 0.0
    %1029 = vmatpush1.msra.mxu0 0.0
    %1030 = vmatprep.subr.mxu0 0.0
    %1031 = vmatpush1.msra.mxu0 0.0
    %1032 = vmatprep.subr.mxu0 0.0
    %1033 = vmatpush1.msra.mxu0 0.0
    %1034 = vmatprep.subr.mxu0 0.0
    %1035 = vmatpush1.msra.mxu0 0.0
    %1036 = vmatprep.subr.mxu0 0.0
    %1037 = vmatpush1.msra.mxu0 0.0
    %1038 = vmatprep.subr.mxu0 0.0
    %1039 = vmatpush1.msra.mxu0 0.0
    %1040 = vmatprep.subr.mxu0 0.0
    %1041 = vmatpush1.msra.mxu0 0.0
    %1042 = vmatprep.subr.mxu0 0.0
    %1043 = vmatpush1.msra.mxu0 0.0
    %1044 = vmatprep.subr.mxu0 0.0
    %1045 = vmatpush1.msra.mxu0 0.0
    %1046 = vmatprep.subr.mxu0 0.0
    %1047 = vmatpush1.msra.mxu0 0.0
    %1048 = vmatprep.subr.mxu0 0.0
    %1049 = vmatpush1.msra.mxu0 0.0
    %1050 = vmatprep.subr.mxu0 0.0
    %1051 = vmatpush1.msra.mxu0 0.0
    %1052 = vmatprep.mubr.f32.mxu0 0.0
    %1053 = vmatmul.mubr.f32.gmra.mrb[0].mxu0 %v986
    %v1054 = vpop.f32.mrb[0].mxu0
    %v1055 = vadd.f32 0.0, %v1054
    %v1056 = vpop.f32.mrb[0].mxu0
    %1057 = vdwg.mxu0
    %s1058 = scalar_lea.vmem [#allocation2], 40
    %v1059 = vld [vmem:[%s1058] sm:$0xff]
    %v1060 = vadd.f32 %v1059, %v1055
    %v1061 = vxor.u32 %v1060, 2147483648
    %v1062 = vmul.f32 %v1061, 1.442695
    %v1063 = vpow.pop %v1062
    %v1064 = vadd.f32 %v1063, 1.0
    %v1065 = vrcp.pop %v1064
    %v1066 = vmul.f32 1.0, %v1065
    %v1067 = vadd.f32 %v1055, %v528
    %1069 = vrot.lane.b32.xlu0 %v1067, 64
    %v1070 = vpop.permute.xlu0 %1069
    %v1072 = vmul.f32 %v1066, %v1070
    %1074 = vrot.lane.b32.xlu0 %v1072, 64
    %v1075 = vpop.permute.xlu0 %1074
    %v1077 = vadd.f32 %v1059, %v1075
    %v1078 = vtanh.pop %v1077
    %v1079 = vsub.f32 1.0, %v1066
    %1081 = vrot.lane.b32.xlu0 %v1078, 96
    %v1082 = vpop.permute.xlu0 %1081
    %v1084 = vmul.f32 %v1079, %v1082
    %v1085 = vmul.f32 %v1066, %v979
    %v1086 = vadd.f32 %v1084, %v1085
    %1088 = vrot.lane.b32.xlu0 %v1086, 96
    %v1089 = vpop.permute.xlu0 %1088
    %s1091 = scalar_lea.vmem [#allocation14], 40
    %1092 = vst.msk [vmem:[%s1091] sm:$0xff] %vm296, %v1089
    %v1093 = vsel %vm296, %v1089, 0
    %1095 = vmatprep.subr.mxu0 0.0
    %1096 = vmatpush1.msra.mxu0 %v435
    %1097 = vmatprep.subr.mxu0 0.0
    %1098 = vmatpush1.msra.mxu0 %v436
    %1099 = vmatprep.subr.mxu0 0.0
    %1100 = vmatpush1.msra.mxu0 %v437
    %1101 = vmatprep.subr.mxu0 0.0
    %1102 = vmatpush1.msra.mxu0 %v438
    %1103 = vmatprep.subr.mxu0 0.0
    %1104 = vmatpush1.msra.mxu0 0.0
    %1105 = vmatprep.subr.mxu0 0.0
    %1106 = vmatpush1.msra.mxu0 0.0
    %1107 = vmatprep.subr.mxu0 0.0
    %1108 = vmatpush1.msra.mxu0 0.0
    %1109 = vmatprep.subr.mxu0 0.0
    %1110 = vmatpush1.msra.mxu0 0.0
    %1111 = vmatprep.subr.mxu0 0.0
    %1112 = vmatpush1.msra.mxu0 0.0
    %1113 = vmatprep.subr.mxu0 0.0
    %1114 = vmatpush1.msra.mxu0 0.0
    %1115 = vmatprep.subr.mxu0 0.0
    %1116 = vmatpush1.msra.mxu0 0.0
    %1117 = vmatprep.subr.mxu0 0.0
    %1118 = vmatpush1.msra.mxu0 0.0
    %1119 = vmatprep.subr.mxu0 0.0
    %1120 = vmatpush1.msra.mxu0 0.0
    %1121 = vmatprep.subr.mxu0 0.0
    %1122 = vmatpush1.msra.mxu0 0.0
    %1123 = vmatprep.subr.mxu0 0.0
    %1124 = vmatpush1.msra.mxu0 0.0
    %1125 = vmatprep.subr.mxu0 0.0
    %1126 = vmatpush1.msra.mxu0 0.0
    %1127 = vmatprep.subr.mxu0 0.0
    %1128 = vmatpush1.msra.mxu0 0.0
    %1129 = vmatprep.subr.mxu0 0.0
    %1130 = vmatpush1.msra.mxu0 0.0
    %1131 = vmatprep.subr.mxu0 0.0
    %1132 = vmatpush1.msra.mxu0 0.0
    %1133 = vmatprep.subr.mxu0 0.0
    %1134 = vmatpush1.msra.mxu0 0.0
    %1135 = vmatprep.subr.mxu0 0.0
    %1136 = vmatpush1.msra.mxu0 0.0
    %1137 = vmatprep.subr.mxu0 0.0
    %1138 = vmatpush1.msra.mxu0 0.0
    %1139 = vmatprep.subr.mxu0 0.0
    %1140 = vmatpush1.msra.mxu0 0.0
    %1141 = vmatprep.subr.mxu0 0.0
    %1142 = vmatpush1.msra.mxu0 0.0
    %1143 = vmatprep.subr.mxu0 0.0
    %1144 = vmatpush1.msra.mxu0 0.0
    %1145 = vmatprep.subr.mxu0 0.0
    %1146 = vmatpush1.msra.mxu0 0.0
    %1147 = vmatprep.subr.mxu0 0.0
    %1148 = vmatpush1.msra.mxu0 0.0
    %1149 = vmatprep.subr.mxu0 0.0
    %1150 = vmatpush1.msra.mxu0 0.0
    %1151 = vmatprep.subr.mxu0 0.0
    %1152 = vmatpush1.msra.mxu0 0.0
    %1153 = vmatprep.subr.mxu0 0.0
    %1154 = vmatpush1.msra.mxu0 0.0
    %1155 = vmatprep.subr.mxu0 0.0
    %1156 = vmatpush1.msra.mxu0 0.0
    %1157 = vmatprep.subr.mxu0 0.0
    %1158 = vmatpush1.msra.mxu0 0.0
    %1159 = vmatprep.mubr.f32.mxu0 0.0
    %1160 = vmatmul.mubr.f32.gmra.mrb[0].mxu0 %v1093
    %v1161 = vpop.f32.mrb[0].mxu0
    %v1162 = vadd.f32 0.0, %v1161
    %v1163 = vpop.f32.mrb[0].mxu0
    %1164 = vdwg.mxu0
    %s1165 = scalar_lea.vmem [#allocation2], 48
    %v1166 = vld [vmem:[%s1165] sm:$0xff]
    %v1167 = vadd.f32 %v1166, %v1162
    %v1168 = vxor.u32 %v1167, 2147483648
    %v1169 = vmul.f32 %v1168, 1.442695
    %v1170 = vpow.pop %v1169
    %v1171 = vadd.f32 %v1170, 1.0
    %v1172 = vrcp.pop %v1171
    %v1173 = vmul.f32 1.0, %v1172
    %v1174 = vadd.f32 %v1162, %v528
    %1176 = vrot.lane.b32.xlu0 %v1174, 64
    %v1177 = vpop.permute.xlu0 %1176
    %v1179 = vmul.f32 %v1173, %v1177
    %1181 = vrot.lane.b32.xlu0 %v1179, 64
    %v1182 = vpop.permute.xlu0 %1181
    %v1184 = vadd.f32 %v1166, %v1182
    %v1185 = vtanh.pop %v1184
    %v1186 = vsub.f32 1.0, %v1173
    %1188 = vrot.lane.b32.xlu0 %v1185, 96
    %v1189 = vpop.permute.xlu0 %1188
    %v1191 = vmul.f32 %v1186, %v1189
    %v1192 = vmul.f32 %v1173, %v1086
    %v1193 = vadd.f32 %v1191, %v1192
    %1195 = vrot.lane.b32.xlu0 %v1193, 96
    %v1196 = vpop.permute.xlu0 %1195
    %s1198 = scalar_lea.vmem [#allocation14], 48
    %1199 = vst.msk [vmem:[%s1198] sm:$0xff] %vm296, %v1196
    %v1200 = vsel %vm296, %v1196, 0
    %1202 = vmatprep.subr.mxu0 0.0
    %1203 = vmatpush1.msra.mxu0 %v435
    %1204 = vmatprep.subr.mxu0 0.0
    %1205 = vmatpush1.msra.mxu0 %v436
    %1206 = vmatprep.subr.mxu0 0.0
    %1207 = vmatpush1.msra.mxu0 %v437
    %1208 = vmatprep.subr.mxu0 0.0
    %1209 = vmatpush1.msra.mxu0 %v438
    %1210 = vmatprep.subr.mxu0 0.0
    %1211 = vmatpush1.msra.mxu0 0.0
    %1212 = vmatprep.subr.mxu0 0.0
    %1213 = vmatpush1.msra.mxu0 0.0
    %1214 = vmatprep.subr.mxu0 0.0
    %1215 = vmatpush1.msra.mxu0 0.0
    %1216 = vmatprep.subr.mxu0 0.0
    %1217 = vmatpush1.msra.mxu0 0.0
    %1218 = vmatprep.subr.mxu0 0.0
    %1219 = vmatpush1.msra.mxu0 0.0
    %1220 = vmatprep.subr.mxu0 0.0
    %1221 = vmatpush1.msra.mxu0 0.0
    %1222 = vmatprep.subr.mxu0 0.0
    %1223 = vmatpush1.msra.mxu0 0.0
    %1224 = vmatprep.subr.mxu0 0.0
    %1225 = vmatpush1.msra.mxu0 0.0
    %1226 = vmatprep.subr.mxu0 0.0
    %1227 = vmatpush1.msra.mxu0 0.0
    %1228 = vmatprep.subr.mxu0 0.0
    %1229 = vmatpush1.msra.mxu0 0.0
    %1230 = vmatprep.subr.mxu0 0.0
    %1231 = vmatpush1.msra.mxu0 0.0
    %1232 = vmatprep.subr.mxu0 0.0
    %1233 = vmatpush1.msra.mxu0 0.0
    %1234 = vmatprep.subr.mxu0 0.0
    %1235 = vmatpush1.msra.mxu0 0.0
    %1236 = vmatprep.subr.mxu0 0.0
    %1237 = vmatpush1.msra.mxu0 0.0
    %1238 = vmatprep.subr.mxu0 0.0
    %1239 = vmatpush1.msra.mxu0 0.0
    %1240 = vmatprep.subr.mxu0 0.0
    %1241 = vmatpush1.msra.mxu0 0.0
    %1242 = vmatprep.subr.mxu0 0.0
    %1243 = vmatpush1.msra.mxu0 0.0
    %1244 = vmatprep.subr.mxu0 0.0
    %1245 = vmatpush1.msra.mxu0 0.0
    %1246 = vmatprep.subr.mxu0 0.0
    %1247 = vmatpush1.msra.mxu0 0.0
    %1248 = vmatprep.subr.mxu0 0.0
    %1249 = vmatpush1.msra.mxu0 0.0
    %1250 = vmatprep.subr.mxu0 0.0
    %1251 = vmatpush1.msra.mxu0 0.0
    %1252 = vmatprep.subr.mxu0 0.0
    %1253 = vmatpush1.msra.mxu0 0.0
    %1254 = vmatprep.subr.mxu0 0.0
    %1255 = vmatpush1.msra.mxu0 0.0
    %1256 = vmatprep.subr.mxu0 0.0
    %1257 = vmatpush1.msra.mxu0 0.0
    %1258 = vmatprep.subr.mxu0 0.0
    %1259 = vmatpush1.msra.mxu0 0.0
    %1260 = vmatprep.subr.mxu0 0.0
    %1261 = vmatpush1.msra.mxu0 0.0
    %1262 = vmatprep.subr.mxu0 0.0
    %1263 = vmatpush1.msra.mxu0 0.0
    %1264 = vmatprep.subr.mxu0 0.0
    %1265 = vmatpush1.msra.mxu0 0.0
    %1266 = vmatprep.mubr.f32.mxu0 0.0
    %1267 = vmatmul.mubr.f32.gmra.mrb[0].mxu0 %v1200
    %v1268 = vpop.f32.mrb[0].mxu0
    %v1269 = vadd.f32 0.0, %v1268
    %v1270 = vpop.f32.mrb[0].mxu0
    %1271 = vdwg.mxu0
    %s1272 = scalar_lea.vmem [#allocation2], 56
    %v1273 = vld [vmem:[%s1272] sm:$0xff]
    %v1274 = vadd.f32 %v1273, %v1269
    %v1275 = vxor.u32 %v1274, 2147483648
    %v1276 = vmul.f32 %v1275, 1.442695
    %v1277 = vpow.pop %v1276
    %v1278 = vadd.f32 %v1277, 1.0
    %v1279 = vrcp.pop %v1278
    %v1280 = vmul.f32 1.0, %v1279
    %v1281 = vadd.f32 %v1269, %v528
    %1283 = vrot.lane.b32.xlu0 %v1281, 64
    %v1284 = vpop.permute.xlu0 %1283
    %v1286 = vmul.f32 %v1280, %v1284
    %1288 = vrot.lane.b32.xlu0 %v1286, 64
    %v1289 = vpop.permute.xlu0 %1288
    %v1291 = vadd.f32 %v1273, %v1289
    %v1292 = vtanh.pop %v1291
    %v1293 = vsub.f32 1.0, %v1280
    %1295 = vrot.lane.b32.xlu0 %v1292, 96
    %v1296 = vpop.permute.xlu0 %1295
    %v1298 = vmul.f32 %v1293, %v1296
    %v1299 = vmul.f32 %v1280, %v1193
    %v1300 = vadd.f32 %v1298, %v1299
    %1302 = vrot.lane.b32.xlu0 %v1300, 96
    %v1303 = vpop.permute.xlu0 %1302
    %s1305 = scalar_lea.vmem [#allocation14], 56
    %1306 = vst.msk [vmem:[%s1305] sm:$0xff] %vm296, %v1303
    %v1307 = vld [vmem:[#allocation14] sm:$0xff]
    %v1308 = vld [vmem:[#allocation14 + $0x8] sm:$0xff]
    %v1309 = vld [vmem:[#allocation14 + $0x10] sm:$0xff]
    %v1310 = vld [vmem:[#allocation14 + $0x18] sm:$0xff]
    %v1311 = vld [vmem:[#allocation14 + $0x20] sm:$0xff]
    %v1312 = vld [vmem:[#allocation14 + $0x28] sm:$0xff]
    %v1313 = vld [vmem:[#allocation14 + $0x30] sm:$0xff]
    %v1314 = vld [vmem:[#allocation14 + $0x38] sm:$0xff]
    %v1315 = vld [vmem:[%s10] sm:$0xff]
    %v1316 = vld [vmem:[%s10 + $0x8] sm:$0xff]
    %v1317 = vld [vmem:[%s10 + $0x10] sm:$0xff]
    %v1318 = vld [vmem:[%s10 + $0x18] sm:$0xff]
    %v1319 = vld [vmem:[%s11] sm:$0x1]
    %v1321 = vlaneseq
    %v1322 = vshrl.u32 %v1321, 7
    %v1323 = vsub.s32 0, %v1322
    %v1324 = vrot.slane %v1319, %v1323
    %v1327 = vsel %vm296, %v1307, 0
    %v1330 = vsel %vm296, %v1308, 0
    %v1333 = vsel %vm296, %v1309, 0
    %v1336 = vsel %vm296, %v1310, 0
    %v1339 = vsel %vm296, %v1311, 0
    %v1342 = vsel %vm296, %v1312, 0
    %v1345 = vsel %vm296, %v1313, 0
    %v1348 = vsel %vm296, %v1314, 0
    %1350 = vmatprep.subr.mxu0 0.0
    %1351 = vmatpush1.msra.mxu0 %v1315
    %1352 = vmatprep.subr.mxu0 0.0
    %1353 = vmatpush1.msra.mxu0 %v1316
    %1354 = vmatprep.subr.mxu0 0.0
    %1355 = vmatpush1.msra.mxu0 %v1317
    %1356 = vmatprep.subr.mxu0 0.0
    %1357 = vmatpush1.msra.mxu0 %v1318
    %1358 = vmatprep.subr.mxu0 0.0
    %1359 = vmatpush1.msra.mxu0 0.0
    %1360 = vmatprep.subr.mxu0 0.0
    %1361 = vmatpush1.msra.mxu0 0.0
    %1362 = vmatprep.subr.mxu0 0.0
    %1363 = vmatpush1.msra.mxu0 0.0
    %1364 = vmatprep.subr.mxu0 0.0
    %1365 = vmatpush1.msra.mxu0 0.0
    %1366 = vmatprep.subr.mxu0 0.0
    %1367 = vmatpush1.msra.mxu0 0.0
    %1368 = vmatprep.subr.mxu0 0.0
    %1369 = vmatpush1.msra.mxu0 0.0
    %1370 = vmatprep.subr.mxu0 0.0
    %1371 = vmatpush1.msra.mxu0 0.0
    %1372 = vmatprep.subr.mxu0 0.0
    %1373 = vmatpush1.msra.mxu0 0.0
    %1374 = vmatprep.subr.mxu0 0.0
    %1375 = vmatpush1.msra.mxu0 0.0
    %1376 = vmatprep.subr.mxu0 0.0
    %1377 = vmatpush1.msra.mxu0 0.0
    %1378 = vmatprep.subr.mxu0 0.0
    %1379 = vmatpush1.msra.mxu0 0.0
    %1380 = vmatprep.subr.mxu0 0.0
    %1381 = vmatpush1.msra.mxu0 0.0
    %1382 = vmatprep.subr.mxu0 0.0
    %1383 = vmatpush1.msra.mxu0 0.0
    %1384 = vmatprep.subr.mxu0 0.0
    %1385 = vmatpush1.msra.mxu0 0.0
    %1386 = vmatprep.subr.mxu0 0.0
    %1387 = vmatpush1.msra.mxu0 0.0
    %1388 = vmatprep.subr.mxu0 0.0
    %1389 = vmatpush1.msra.mxu0 0.0
    %1390 = vmatprep.subr.mxu0 0.0
    %1391 = vmatpush1.msra.mxu0 0.0
    %1392 = vmatprep.subr.mxu0 0.0
    %1393 = vmatpush1.msra.mxu0 0.0
    %1394 = vmatprep.subr.mxu0 0.0
    %1395 = vmatpush1.msra.mxu0 0.0
    %1396 = vmatprep.subr.mxu0 0.0
    %1397 = vmatpush1.msra.mxu0 0.0
    %1398 = vmatprep.subr.mxu0 0.0
    %1399 = vmatpush1.msra.mxu0 0.0
    %1400 = vmatprep.subr.mxu0 0.0
    %1401 = vmatpush1.msra.mxu0 0.0
    %1402 = vmatprep.subr.mxu0 0.0
    %1403 = vmatpush1.msra.mxu0 0.0
    %1404 = vmatprep.subr.mxu0 0.0
    %1405 = vmatpush1.msra.mxu0 0.0
    %1406 = vmatprep.subr.mxu0 0.0
    %1407 = vmatpush1.msra.mxu0 0.0
    %1408 = vmatprep.subr.mxu0 0.0
    %1409 = vmatpush1.msra.mxu0 0.0
    %1410 = vmatprep.subr.mxu0 0.0
    %1411 = vmatpush1.msra.mxu0 0.0
    %1412 = vmatprep.subr.mxu0 0.0
    %1413 = vmatpush1.msra.mxu0 0.0
    %1414 = vmatprep.mubr.f32.mxu0 0.0
    %1415 = vmatmul.mubr.f32.gmra.mrb[0].mxu0 %v1327
    %v1416 = vpop.f32.mrb[0].mxu0
    %v1417 = vadd.f32 %v1324, %v1416
    %v1418 = vpop.f32.mrb[0].mxu0
    %1419 = vmatprep.mubr.f32.mxu0 0.0
    %1420 = vmatmul.mubr.f32.gmra.mrb[0].mxu0 %v1330
    %v1421 = vpop.f32.mrb[0].mxu0
    %v1422 = vadd.f32 %v1324, %v1421
    %v1423 = vpop.f32.mrb[0].mxu0
    %1424 = vmatprep.mubr.f32.mxu0 0.0
    %1425 = vmatmul.mubr.f32.gmra.mrb[0].mxu0 %v1333
    %v1426 = vpop.f32.mrb[0].mxu0
    %v1427 = vadd.f32 %v1324, %v1426
    %v1428 = vpop.f32.mrb[0].mxu0
    %1429 = vmatprep.mubr.f32.mxu0 0.0
    %1430 = vmatmul.mubr.f32.gmra.mrb[0].mxu0 %v1336
    %v1431 = vpop.f32.mrb[0].mxu0
    %v1432 = vadd.f32 %v1324, %v1431
    %v1433 = vpop.f32.mrb[0].mxu0
    %1434 = vmatprep.mubr.f32.mxu0 0.0
    %1435 = vmatmul.mubr.f32.gmra.mrb[0].mxu0 %v1339
    %v1436 = vpop.f32.mrb[0].mxu0
    %v1437 = vadd.f32 %v1324, %v1436
    %v1438 = vpop.f32.mrb[0].mxu0
    %1439 = vmatprep.mubr.f32.mxu0 0.0
    %1440 = vmatmul.mubr.f32.gmra.mrb[0].mxu0 %v1342
    %v1441 = vpop.f32.mrb[0].mxu0
    %v1442 = vadd.f32 %v1324, %v1441
    %v1443 = vpop.f32.mrb[0].mxu0
    %1444 = vmatprep.mubr.f32.mxu0 0.0
    %1445 = vmatmul.mubr.f32.gmra.mrb[0].mxu0 %v1345
    %v1446 = vpop.f32.mrb[0].mxu0
    %v1447 = vadd.f32 %v1324, %v1446
    %v1448 = vpop.f32.mrb[0].mxu0
    %1449 = vmatprep.mubr.f32.mxu0 0.0
    %1450 = vmatmul.mubr.f32.gmra.mrb[0].mxu0 %v1348
    %v1451 = vpop.f32.mrb[0].mxu0
    %v1452 = vadd.f32 %v1324, %v1451
    %v1453 = vpop.f32.mrb[0].mxu0
    %1454 = vdwg.mxu0
    %v1455 = vld [vmem:[#allocation12] sm:$0xff]
    %v1456 = vld [vmem:[#allocation12 + $0x8] sm:$0xff]
    %v1457 = vld [vmem:[#allocation12 + $0x10] sm:$0xff]
    %v1458 = vld [vmem:[#allocation12 + $0x18] sm:$0xff]
    %v1459 = vld [vmem:[%s9] sm:$0x1]
    %v1461 = vlaneseq
    %v1462 = vshrl.u32 %v1461, 7
    %v1463 = vsub.s32 0, %v1462
    %v1464 = vrot.slane %v1459, %v1463
    %1466 = vmatprep.subr.mxu0 0.0
    %1467 = vmatpush1.msra.mxu0 %v1455
    %1468 = vmatprep.subr.mxu0 0.0
    %1469 = vmatpush1.msra.mxu0 %v1456
    %1470 = vmatprep.subr.mxu0 0.0
    %1471 = vmatpush1.msra.mxu0 %v1457
    %1472 = vmatprep.subr.mxu0 0.0
    %1473 = vmatpush1.msra.mxu0 %v1458
    %1474 = vmatprep.subr.mxu0 0.0
    %1475 = vmatpush1.msra.mxu0 0.0
    %1476 = vmatprep.subr.mxu0 0.0
    %1477 = vmatpush1.msra.mxu0 0.0
    %1478 = vmatprep.subr.mxu0 0.0
    %1479 = vmatpush1.msra.mxu0 0.0
    %1480 = vmatprep.subr.mxu0 0.0
    %1481 = vmatpush1.msra.mxu0 0.0
    %1482 = vmatprep.subr.mxu0 0.0
    %1483 = vmatpush1.msra.mxu0 0.0
    %1484 = vmatprep.subr.mxu0 0.0
    %1485 = vmatpush1.msra.mxu0 0.0
    %1486 = vmatprep.subr.mxu0 0.0
    %1487 = vmatpush1.msra.mxu0 0.0
    %1488 = vmatprep.subr.mxu0 0.0
    %1489 = vmatpush1.msra.mxu0 0.0
    %1490 = vmatprep.subr.mxu0 0.0
    %1491 = vmatpush1.msra.mxu0 0.0
    %1492 = vmatprep.subr.mxu0 0.0
    %1493 = vmatpush1.msra.mxu0 0.0
    %1494 = vmatprep.subr.mxu0 0.0
    %1495 = vmatpush1.msra.mxu0 0.0
    %1496 = vmatprep.subr.mxu0 0.0
    %1497 = vmatpush1.msra.mxu0 0.0
    %1498 = vmatprep.subr.mxu0 0.0
    %1499 = vmatpush1.msra.mxu0 0.0
    %1500 = vmatprep.subr.mxu0 0.0
    %1501 = vmatpush1.msra.mxu0 0.0
    %1502 = vmatprep.subr.mxu0 0.0
    %1503 = vmatpush1.msra.mxu0 0.0
    %1504 = vmatprep.subr.mxu0 0.0
    %1505 = vmatpush1.msra.mxu0 0.0
    %1506 = vmatprep.subr.mxu0 0.0
    %1507 = vmatpush1.msra.mxu0 0.0
    %1508 = vmatprep.subr.mxu0 0.0
    %1509 = vmatpush1.msra.mxu0 0.0
    %1510 = vmatprep.subr.mxu0 0.0
    %1511 = vmatpush1.msra.mxu0 0.0
    %1512 = vmatprep.subr.mxu0 0.0
    %1513 = vmatpush1.msra.mxu0 0.0
    %1514 = vmatprep.subr.mxu0 0.0
    %1515 = vmatpush1.msra.mxu0 0.0
    %1516 = vmatprep.subr.mxu0 0.0
    %1517 = vmatpush1.msra.mxu0 0.0
    %1518 = vmatprep.subr.mxu0 0.0
    %1519 = vmatpush1.msra.mxu0 0.0
    %1520 = vmatprep.subr.mxu0 0.0
    %1521 = vmatpush1.msra.mxu0 0.0
    %1522 = vmatprep.subr.mxu0 0.0
    %1523 = vmatpush1.msra.mxu0 0.0
    %1524 = vmatprep.subr.mxu0 0.0
    %1525 = vmatpush1.msra.mxu0 0.0
    %1526 = vmatprep.subr.mxu0 0.0
    %1527 = vmatpush1.msra.mxu0 0.0
    %1528 = vmatprep.subr.mxu0 0.0
    %1529 = vmatpush1.msra.mxu0 0.0
    %1530 = vmatprep.mubr.f32.mxu0 0.0
    %1531 = vmatmul.mubr.f32.gmra.mrb[0].mxu0 %v1327
    %v1532 = vpop.f32.mrb[0].mxu0
    %v1533 = vadd.f32 %v1464, %v1532
    %v1534 = vpop.f32.mrb[0].mxu0
    %1535 = vmatprep.mubr.f32.mxu0 0.0
    %1536 = vmatmul.mubr.f32.gmra.mrb[0].mxu0 %v1330
    %v1537 = vpop.f32.mrb[0].mxu0
    %v1538 = vadd.f32 %v1464, %v1537
    %v1539 = vpop.f32.mrb[0].mxu0
    %1540 = vmatprep.mubr.f32.mxu0 0.0
    %1541 = vmatmul.mubr.f32.gmra.mrb[0].mxu0 %v1333
    %v1542 = vpop.f32.mrb[0].mxu0
    %v1543 = vadd.f32 %v1464, %v1542
    %v1544 = vpop.f32.mrb[0].mxu0
    %1545 = vmatprep.mubr.f32.mxu0 0.0
    %1546 = vmatmul.mubr.f32.gmra.mrb[0].mxu0 %v1336
    %v1547 = vpop.f32.mrb[0].mxu0
    %v1548 = vadd.f32 %v1464, %v1547
    %v1549 = vpop.f32.mrb[0].mxu0
    %1550 = vmatprep.mubr.f32.mxu0 0.0
    %1551 = vmatmul.mubr.f32.gmra.mrb[0].mxu0 %v1339
    %v1552 = vpop.f32.mrb[0].mxu0
    %v1553 = vadd.f32 %v1464, %v1552
    %v1554 = vpop.f32.mrb[0].mxu0
    %1555 = vmatprep.mubr.f32.mxu0 0.0
    %1556 = vmatmul.mubr.f32.gmra.mrb[0].mxu0 %v1342
    %v1557 = vpop.f32.mrb[0].mxu0
    %v1558 = vadd.f32 %v1464, %v1557
    %v1559 = vpop.f32.mrb[0].mxu0
    %1560 = vmatprep.mubr.f32.mxu0 0.0
    %1561 = vmatmul.mubr.f32.gmra.mrb[0].mxu0 %v1345
    %v1562 = vpop.f32.mrb[0].mxu0
    %v1563 = vadd.f32 %v1464, %v1562
    %v1564 = vpop.f32.mrb[0].mxu0
    %1565 = vmatprep.mubr.f32.mxu0 0.0
    %1566 = vmatmul.mubr.f32.gmra.mrb[0].mxu0 %v1348
    %v1567 = vpop.f32.mrb[0].mxu0
    %v1568 = vadd.f32 %v1464, %v1567
    %v1569 = vpop.f32.mrb[0].mxu0
    %1570 = vdwg.mxu0
    %1571 = vst [vmem:[#allocation15] sm:$0xff] %v1533
    %1572 = vst [vmem:[#allocation15 + $0x8] sm:$0xff] %v1538
    %1573 = vst [vmem:[#allocation15 + $0x10] sm:$0xff] %v1543
    %1574 = vst [vmem:[#allocation15 + $0x18] sm:$0xff] %v1548
    %1575 = vst [vmem:[#allocation15 + $0x20] sm:$0xff] %v1553
    %1576 = vst [vmem:[#allocation15 + $0x28] sm:$0xff] %v1558
    %1577 = vst [vmem:[#allocation15 + $0x30] sm:$0xff] %v1563
    %1578 = vst [vmem:[#allocation15 + $0x38] sm:$0xff] %v1568
    %1579 = vst [vmem:[#allocation17] sm:$0xff] %v1417
    %1580 = vst [vmem:[#allocation17 + $0x8] sm:$0xff] %v1422
    %1581 = vst [vmem:[#allocation17 + $0x10] sm:$0xff] %v1427
    %1582 = vst [vmem:[#allocation17 + $0x18] sm:$0xff] %v1432
    %1583 = vst [vmem:[#allocation17 + $0x20] sm:$0xff] %v1437
    %1584 = vst [vmem:[#allocation17 + $0x28] sm:$0xff] %v1442
    %1585 = vst [vmem:[#allocation17 + $0x30] sm:$0xff] %v1447
    %1586 = vst [vmem:[#allocation17 + $0x38] sm:$0xff] %v1452
    // Predicated region
    $region74: #{tpu_custom_call.1} parent=1 // pred_check
      _
    $region75: #{tpu_custom_call.1} parent=1 // pred_check_branch
      %1588 = sbr.rel (0) target = $region77
    $region76: #{tpu_custom_call.1} parent=1 // pred_region
      %s1590 = ssub.s32 1024, 1024
      %1591 = vsyncadd [#allocation5], %s1590
      %s1592 = sshll.u32 [#allocation14], 4
      %s1593 = int_to_ptr.vmem [resolvable:$true] %s1592
      %1598 = dma.vmem_to_hbm [thread:$0]  %s1593, 1024, %s12, [#allocation5], 128, 128, 8
    $region77: #{tpu_custom_call.1} parent=1 // pred_fallthru
      _
    // Predicated region
    $region78: #{tpu_custom_call.1} parent=1 // pred_check
      _
    $region79: #{tpu_custom_call.1} parent=1 // pred_check_branch
      %1600 = sbr.rel (0) target = $region81
    $region80: #{tpu_custom_call.1} parent=1 // pred_region
      %s1602 = ssub.s32 1024, 1024
      %1603 = vsyncadd [#allocation16], %s1602
      %s1604 = sshll.u32 [#allocation15], 4
      %s1605 = int_to_ptr.vmem [resolvable:$true] %s1604
      %1610 = dma.vmem_to_hbm [thread:$0]  %s1605, 1024, %s13, [#allocation16], 128, 128, 8
    $region81: #{tpu_custom_call.1} parent=1 // pred_fallthru
      _
    // Predicated region
    $region82: #{tpu_custom_call.1} parent=1 // pred_check
      _
    $region83: #{tpu_custom_call.1} parent=1 // pred_check_branch
      %1612 = sbr.rel (0) target = $region85
    $region84: #{tpu_custom_call.1} parent=1 // pred_region
      %s1614 = ssub.s32 1024, 1024
      %1615 = vsyncadd [#allocation16], %s1614
      %s1616 = sshll.u32 [#allocation17], 4
      %s1617 = int_to_ptr.vmem [resolvable:$true] %s1616
      %1622 = dma.vmem_to_hbm [thread:$0]  %s1617, 1024, %s14, [#allocation16], 128, 128, 8
    $region85: #{tpu_custom_call.1} parent=1 // pred_fallthru
      _
    // Predicated region
    $region86: #{tpu_custom_call.1} parent=1 // pred_check
      _
    $region87: #{tpu_custom_call.1} parent=1 // pred_check_branch
      %1624 = sbr.rel (0) target = $region89
    $region88: #{tpu_custom_call.1} parent=1 // pred_region
      %1625 = dma.done [#allocation5], 1024
    $region89: #{tpu_custom_call.1} parent=1 // pred_fallthru
      _
    // Predicated region
    $region90: #{tpu_custom_call.1} parent=1 // pred_check
      _
    $region91: #{tpu_custom_call.1} parent=1 // pred_check_branch
      %1627 = sbr.rel (0) target = $region93
    $region92: #{tpu_custom_call.1} parent=1 // pred_region
      %1628 = dma.done [#allocation16], 1024
    $region93: #{tpu_custom_call.1} parent=1 // pred_fallthru
      _
    // Predicated region
    $region94: #{tpu_custom_call.1} parent=1 // pred_check
      _
    $region95: #{tpu_custom_call.1} parent=1 // pred_check_branch
      %1630 = sbr.rel (0) target = $region97
    $region96: #{tpu_custom_call.1} parent=1 // pred_region
      %1631 = dma.done [#allocation16], 1024
    $region97: #{tpu_custom_call.1} parent=1 // pred_fallthru
      _
    %1632 = vsyncpa [#allocation4], 1
    %1633 = vsyncpa [#allocation7], 1
    %1634 = vsyncpa [#allocation10], 1
    %1635 = vsyncpa [#allocation13], 1
    %1636 = vsyncpa [#allocation5], 1
    %1637 = vsyncpa [#allocation16], 1

</llo_original>
